<compile_context>
chip_gen: v7x
topology: tpu7x:2x2x1
jax: 0.10.0
libtpu: 0.0.40
codegen_flags: <defaults>
</compile_context>

<pallas_src>
import functools

import jax
import jax.numpy as jnp
from jax.experimental import pallas as pl
from jax.experimental.pallas import tpu as pltpu


# ------------------------- fused Pallas kernel -------------------------

def _fused_forward_kernel(*refs, T, B, H, num_layers):
    """Whole forward pass in one kernel invocation (no grid).

    refs layout:
      refs[0]                      : x_flat  (T*B, D_in)   time-major, flattened
      refs[1 + 3*l .. 3 + 3*l]     : layer l (wih_T (D_l,4H), whh_T (H,4H), bias (1,4H))
      refs[1 + 3*L]                : w_fc_row (1, H)
      refs[2 + 3*L]                : b_fc_row (1, 1)
      refs[3 + 3*L]                : out      (B, 1)        output
      refs[4 + 3*L]                : seq_scratch (T*B, H)   VMEM scratch
    """
    base = 1 + 3 * num_layers
    x_ref = refs[0]
    wfc_ref = refs[base]
    bfc_ref = refs[base + 1]
    out_ref = refs[base + 2]
    seq_scratch = refs[base + 3]

    # Lane-index mask selecting the g-gate band (lanes [2H, 3H) of the 4H=128
    # lane gate vreg). Hoisted out of all loops.
    lane = jax.lax.broadcasted_iota(jnp.int32, (B, 4 * H), 1)
    g_band = (lane >= 2 * H) & (lane < 3 * H)

    seq = x_ref[...]                                  # layer-0 input, (T*B, D_in)
    h = jnp.zeros((B, H), jnp.float32)

    for l in range(num_layers):
        wih_ref = refs[1 + 3 * l]
        whh_ref = refs[2 + 3 * l]
        b_ref = refs[3 + 3 * l]

        # Hoisted input projection: one big MXU matmul over all T timesteps,
        # bias broadcast done once per layer (not per step).
        gx = (jnp.dot(seq, wih_ref[...], preferred_element_type=jnp.float32)
              + b_ref[...])                           # (T*B, 4H)
        whh = whh_ref[...]                            # (H, 4H), read once

        h = jnp.zeros((B, H), jnp.float32)
        c = jnp.zeros((B, H), jnp.float32)
        last_layer = (l == num_layers - 1)

        for t in range(T):                            # serial recurrence, unrolled
            gates = gx[t * B:(t + 1) * B, :] + jnp.dot(
                h, whh, preferred_element_type=jnp.float32)      # (B, 4H)
            # Activate the full 4H-lane vreg once, then slice gate bands.
            act = jnp.where(g_band, jnp.tanh(gates), jax.nn.sigmoid(gates))
            i_g = act[:, 0:H]
            f_g = act[:, H:2 * H]
            g_g = act[:, 2 * H:3 * H]
            o_g = act[:, 3 * H:4 * H]
            c = f_g * c + i_g * g_g
            h = o_g * jnp.tanh(c)
            if not last_layer:
                # Keep the full sequence in VMEM only (never touches HBM);
                # it feeds the next layer's hoisted input projection.
                seq_scratch[t * B:(t + 1) * B, :] = h

        if not last_layer:
            seq = seq_scratch[...]                    # (T*B, H)

    # Final Linear(hidden, 1), folded in: VPU multiply + lane reduction.
    w_fc = wfc_ref[...]                               # (1, H)
    b_fc = bfc_ref[...]                               # (1, 1)
    out_ref[...] = jnp.sum(h * w_fc, axis=-1, keepdims=True) + b_fc


# ------------------------- wrapper -------------------------

def lstm_forward(x_btd, params):
    """Full model forward, matching the PyTorch module.

    x_btd : (B, T, input_size) batch_first, like PyTorch.
    params: dict with per-layer LSTM weights and fc weights.
    returns: (B, 1)
    """
    x_btd = x_btd.astype(jnp.float32)
    B, T, D = x_btd.shape
    num_layers = len(params["lstm_layers"])
    H = params["lstm_layers"][0]["whh_T"].shape[0]

    # batch_first -> time-major, flattened so the layer-0 input projection is
    # a single large MXU matmul inside the kernel.
    x_flat = jnp.transpose(x_btd, (1, 0, 2)).reshape(T * B, D)

    flat_inputs = [x_flat]
    for layer in params["lstm_layers"]:
        flat_inputs += [layer["wih_T"], layer["whh_T"], layer["bias_row"]]
    flat_inputs += [params["w_fc_row"], params["b_fc_row"]]

    kernel = functools.partial(_fused_forward_kernel,
                               T=T, B=B, H=H, num_layers=num_layers)

    return pl.pallas_call(
        kernel,
        out_shape=jax.ShapeDtypeStruct((B, 1), jnp.float32),
        in_specs=[pl.BlockSpec(memory_space=pltpu.MemorySpace.VMEM)
                  for _ in flat_inputs],
        out_specs=pl.BlockSpec(memory_space=pltpu.MemorySpace.VMEM),
        scratch_shapes=[pltpu.VMEM((T * B, H), jnp.float32)],
    )(*flat_inputs)


# ------------------------- param init (deterministic) -------------------------

def init_params(key, input_size, hidden_size, num_layers):
    """PyTorch-style uniform(-1/sqrt(H), 1/sqrt(H)) init, deterministic."""
    k = 1.0 / jnp.sqrt(jnp.float32(hidden_size))
    layers = []
    for l in range(num_layers):
        d_in = input_size if l == 0 else hidden_size
        key, k1, k2, k3, k4 = jax.random.split(key, 5)
        wih = jax.random.uniform(k1, (4 * hidden_size, d_in), jnp.float32, -k, k)
        whh = jax.random.uniform(k2, (4 * hidden_size, hidden_size), jnp.float32, -k, k)
        bih = jax.random.uniform(k3, (4 * hidden_size,), jnp.float32, -k, k)
        bhh = jax.random.uniform(k4, (4 * hidden_size,), jnp.float32, -k, k)
        layers.append({
            "wih_T": wih.T,                                    # (D_in, 4H)
            "whh_T": whh.T,                                    # (H, 4H)
            "bias_row": (bih + bhh).reshape(1, 4 * hidden_size),
        })
    key, k5, k6 = jax.random.split(key, 3)
    kf = 1.0 / jnp.sqrt(jnp.float32(hidden_size))
    w_fc = jax.random.uniform(k5, (1, hidden_size), jnp.float32, -kf, kf)
    b_fc = jax.random.uniform(k6, (1,), jnp.float32, -kf, kf)
    return {
        "lstm_layers": layers,
        "w_fc_row": w_fc,                 # (1, H)
        "b_fc_row": b_fc.reshape(1, 1),   # (1, 1)
    }


# ------------------------- pure-JAX reference -------------------------

def lstm_forward_ref(x_btd, params):
    x_tbd = jnp.transpose(x_btd, (1, 0, 2)).astype(jnp.float32)
    seq = x_tbd
    for layer in params["lstm_layers"]:
        T, B, _ = seq.shape
        H = layer["whh_T"].shape[0]
        h = jnp.zeros((B, H), jnp.float32)
        c = jnp.zeros((B, H), jnp.float32)
        outs = []
        for t in range(T):
            gates = seq[t] @ layer["wih_T"] + h @ layer["whh_T"] + layer["bias_row"]
            i_g = jax.nn.sigmoid(gates[:, 0:H])
            f_g = jax.nn.sigmoid(gates[:, H:2 * H])
            g_g = jnp.tanh(gates[:, 2 * H:3 * H])
            o_g = jax.nn.sigmoid(gates[:, 3 * H:4 * H])
            c = f_g * c + i_g * g_g
            h = o_g * jnp.tanh(c)
            outs.append(h)
        seq = jnp.stack(outs, axis=0)
    return seq[-1] @ params["w_fc_row"].T + params["b_fc_row"]


# ------------------------- main -------------------------

if __name__ == "__main__":
    batch, seq_len, input_size, hidden_size, num_layers = 8, 8, 16, 32, 2

    key = jax.random.PRNGKey(0)
    key, kx, kp = jax.random.split(key, 3)
    x = jax.random.normal(kx, (batch, seq_len, input_size), jnp.float32)
    params = init_params(kp, input_size, hidden_size, num_layers)

    out = lstm_forward(x, params)
    out = jax.block_until_ready(out)

    ref = lstm_forward_ref(x, params)
    assert out.shape == (batch, 1), out.shape
    assert jnp.allclose(out, ref, atol=1e-4, rtol=1e-4), (
        f"mismatch: max abs err {jnp.max(jnp.abs(out - ref))}")

    print("KERNEL_OK")
</pallas_src>

<mosaic_0001>
module attributes {stable_mosaic.version = 11 : i64} {
  func.func @_fused_forward_kernel(%arg0: memref<64x16xf32, #tpu.memory_space<vmem>>, %arg1: memref<16x128xf32, #tpu.memory_space<vmem>>, %arg2: memref<32x128xf32, #tpu.memory_space<vmem>>, %arg3: memref<1x128xf32, #tpu.memory_space<vmem>>, %arg4: memref<32x128xf32, #tpu.memory_space<vmem>>, %arg5: memref<32x128xf32, #tpu.memory_space<vmem>>, %arg6: memref<1x128xf32, #tpu.memory_space<vmem>>, %arg7: memref<1x32xf32, #tpu.memory_space<vmem>>, %arg8: memref<1x1xf32, #tpu.memory_space<vmem>>, %arg9: memref<8x1xf32, #tpu.memory_space<vmem>>, %arg10: memref<64x32xf32, #tpu.memory_space<vmem>>) attributes {dimension_semantics = [], scalar_prefetch = 0 : i64, scratch_operands = 1 : i64, tpu.core_type = #tpu.core_type<tc>} {
    %0 = tpu.iota {dimensions = array<i32: 1>} : vector<8x128xi32>
    %c64_i32 = arith.constant 64 : i32
    %1 = vector.broadcast %c64_i32 : i32 to vector<8x128xi32>
    %2 = arith.cmpi sge, %0, %1 : vector<8x128xi32>
    %c96_i32 = arith.constant 96 : i32
    %3 = vector.broadcast %c96_i32 : i32 to vector<8x128xi32>
    %4 = arith.cmpi slt, %0, %3 : vector<8x128xi32>
    %5 = arith.andi %2, %4 : vector<8x128xi1>
    %c0 = arith.constant 0 : index
    %c0_0 = arith.constant 0 : index
    %6 = vector.load %arg0[%c0, %c0_0] : memref<64x16xf32, #tpu.memory_space<vmem>>, vector<64x16xf32>
    %c0_1 = arith.constant 0 : index
    %c0_2 = arith.constant 0 : index
    %7 = vector.load %arg1[%c0_1, %c0_2] : memref<16x128xf32, #tpu.memory_space<vmem>>, vector<16x128xf32>
    %cst = arith.constant dense<0.000000e+00> : vector<64x128xf32>
    %8 = tpu.matmul %6, %7, %cst {dimension_numbers = #tpu.dot_dimension_numbers<[1], [0], [0], [1], [0, 0, 1, 1], [], []>} : vector<64x16xf32>, vector<16x128xf32>, vector<64x128xf32> -> vector<64x128xf32>
    %c0_3 = arith.constant 0 : index
    %c0_4 = arith.constant 0 : index
    %9 = vector.load %arg3[%c0_3, %c0_4] : memref<1x128xf32, #tpu.memory_space<vmem>>, vector<1x128xf32>
    %10 = vector.broadcast %9 : vector<1x128xf32> to vector<64x128xf32>
    %11 = arith.addf %8, %10 : vector<64x128xf32>
    %c0_5 = arith.constant 0 : index
    %c0_6 = arith.constant 0 : index
    %12 = vector.load %arg2[%c0_5, %c0_6] : memref<32x128xf32, #tpu.memory_space<vmem>>, vector<32x128xf32>
    %cst_7 = arith.constant 0.000000e+00 : f32
    %13 = vector.broadcast %cst_7 : f32 to vector<8x32xf32>
    %cst_8 = arith.constant 0.000000e+00 : f32
    %14 = vector.broadcast %cst_8 : f32 to vector<8x32xf32>
    %15 = vector.extract_strided_slice %11 {offsets = [0, 0], sizes = [8, 128], strides = [1, 1]} : vector<64x128xf32> to vector<8x128xf32>
    %cst_9 = arith.constant dense<0.000000e+00> : vector<8x128xf32>
    %16 = tpu.matmul %13, %12, %cst_9 {dimension_numbers = #tpu.dot_dimension_numbers<[1], [0], [0], [1], [0, 0, 1, 1], [], []>} : vector<8x32xf32>, vector<32x128xf32>, vector<8x128xf32> -> vector<8x128xf32>
    %17 = arith.addf %15, %16 : vector<8x128xf32>
    %18 = math.tanh %17 : vector<8x128xf32>
    %19 = arith.negf %17 : vector<8x128xf32>
    %20 = math.exp %19 : vector<8x128xf32>
    %cst_10 = arith.constant 1.000000e+00 : f32
    %21 = vector.broadcast %cst_10 : f32 to vector<8x128xf32>
    %22 = arith.addf %21, %20 : vector<8x128xf32>
    %23 = arith.divf %21, %22 : vector<8x128xf32>
    %24 = arith.select %5, %18, %23 : vector<8x128xi1>, vector<8x128xf32>
    %25 = vector.extract_strided_slice %24 {offsets = [0, 0], sizes = [8, 32], strides = [1, 1]} : vector<8x128xf32> to vector<8x32xf32>
    %26 = vector.extract_strided_slice %24 {offsets = [0, 32], sizes = [8, 32], strides = [1, 1]} : vector<8x128xf32> to vector<8x32xf32>
    %27 = vector.extract_strided_slice %24 {offsets = [0, 64], sizes = [8, 32], strides = [1, 1]} : vector<8x128xf32> to vector<8x32xf32>
    %28 = vector.extract_strided_slice %24 {offsets = [0, 96], sizes = [8, 32], strides = [1, 1]} : vector<8x128xf32> to vector<8x32xf32>
    %29 = arith.mulf %26, %14 : vector<8x32xf32>
    %30 = arith.mulf %25, %27 : vector<8x32xf32>
    %31 = arith.addf %29, %30 : vector<8x32xf32>
    %32 = math.tanh %31 : vector<8x32xf32>
    %33 = arith.mulf %28, %32 : vector<8x32xf32>
    %c0_11 = arith.constant 0 : index
    %c0_12 = arith.constant 0 : index
    %34 = vector.load %arg10[%c0_11, %c0_12] : memref<64x32xf32, #tpu.memory_space<vmem>>, vector<8x32xf32>
    tpu.vector_store %arg10[%c0_11, %c0_12], %33 {strides = array<i32>} : memref<64x32xf32, #tpu.memory_space<vmem>>, vector<8x32xf32>,
    %35 = vector.extract_strided_slice %11 {offsets = [8, 0], sizes = [8, 128], strides = [1, 1]} : vector<64x128xf32> to vector<8x128xf32>
    %cst_13 = arith.constant dense<0.000000e+00> : vector<8x128xf32>
    %36 = tpu.matmul %33, %12, %cst_13 {dimension_numbers = #tpu.dot_dimension_numbers<[1], [0], [0], [1], [0, 0, 1, 1], [], []>} : vector<8x32xf32>, vector<32x128xf32>, vector<8x128xf32> -> vector<8x128xf32>
    %37 = arith.addf %35, %36 : vector<8x128xf32>
    %38 = math.tanh %37 : vector<8x128xf32>
    %39 = arith.negf %37 : vector<8x128xf32>
    %40 = math.exp %39 : vector<8x128xf32>
    %cst_14 = arith.constant 1.000000e+00 : f32
    %41 = vector.broadcast %cst_14 : f32 to vector<8x128xf32>
    %42 = arith.addf %41, %40 : vector<8x128xf32>
    %43 = arith.divf %41, %42 : vector<8x128xf32>
    %44 = arith.select %5, %38, %43 : vector<8x128xi1>, vector<8x128xf32>
    %45 = vector.extract_strided_slice %44 {offsets = [0, 0], sizes = [8, 32], strides = [1, 1]} : vector<8x128xf32> to vector<8x32xf32>
    %46 = vector.extract_strided_slice %44 {offsets = [0, 32], sizes = [8, 32], strides = [1, 1]} : vector<8x128xf32> to vector<8x32xf32>
    %47 = vector.extract_strided_slice %44 {offsets = [0, 64], sizes = [8, 32], strides = [1, 1]} : vector<8x128xf32> to vector<8x32xf32>
    %48 = vector.extract_strided_slice %44 {offsets = [0, 96], sizes = [8, 32], strides = [1, 1]} : vector<8x128xf32> to vector<8x32xf32>
    %49 = arith.mulf %46, %31 : vector<8x32xf32>
    %50 = arith.mulf %45, %47 : vector<8x32xf32>
    %51 = arith.addf %49, %50 : vector<8x32xf32>
    %52 = math.tanh %51 : vector<8x32xf32>
    %53 = arith.mulf %48, %52 : vector<8x32xf32>
    %c8 = arith.constant 8 : index
    %c0_15 = arith.constant 0 : index
    %54 = vector.load %arg10[%c8, %c0_15] : memref<64x32xf32, #tpu.memory_space<vmem>>, vector<8x32xf32>
    tpu.vector_store %arg10[%c8, %c0_15], %53 {strides = array<i32>} : memref<64x32xf32, #tpu.memory_space<vmem>>, vector<8x32xf32>,
    %55 = vector.extract_strided_slice %11 {offsets = [16, 0], sizes = [8, 128], strides = [1, 1]} : vector<64x128xf32> to vector<8x128xf32>
    %cst_16 = arith.constant dense<0.000000e+00> : vector<8x128xf32>
    %56 = tpu.matmul %53, %12, %cst_16 {dimension_numbers = #tpu.dot_dimension_numbers<[1], [0], [0], [1], [0, 0, 1, 1], [], []>} : vector<8x32xf32>, vector<32x128xf32>, vector<8x128xf32> -> vector<8x128xf32>
    %57 = arith.addf %55, %56 : vector<8x128xf32>
    %58 = math.tanh %57 : vector<8x128xf32>
    %59 = arith.negf %57 : vector<8x128xf32>
    %60 = math.exp %59 : vector<8x128xf32>
    %cst_17 = arith.constant 1.000000e+00 : f32
    %61 = vector.broadcast %cst_17 : f32 to vector<8x128xf32>
    %62 = arith.addf %61, %60 : vector<8x128xf32>
    %63 = arith.divf %61, %62 : vector<8x128xf32>
    %64 = arith.select %5, %58, %63 : vector<8x128xi1>, vector<8x128xf32>
    %65 = vector.extract_strided_slice %64 {offsets = [0, 0], sizes = [8, 32], strides = [1, 1]} : vector<8x128xf32> to vector<8x32xf32>
    %66 = vector.extract_strided_slice %64 {offsets = [0, 32], sizes = [8, 32], strides = [1, 1]} : vector<8x128xf32> to vector<8x32xf32>
    %67 = vector.extract_strided_slice %64 {offsets = [0, 64], sizes = [8, 32], strides = [1, 1]} : vector<8x128xf32> to vector<8x32xf32>
    %68 = vector.extract_strided_slice %64 {offsets = [0, 96], sizes = [8, 32], strides = [1, 1]} : vector<8x128xf32> to vector<8x32xf32>
    %69 = arith.mulf %66, %51 : vector<8x32xf32>
    %70 = arith.mulf %65, %67 : vector<8x32xf32>
    %71 = arith.addf %69, %70 : vector<8x32xf32>
    %72 = math.tanh %71 : vector<8x32xf32>
    %73 = arith.mulf %68, %72 : vector<8x32xf32>
    %c16 = arith.constant 16 : index
    %c0_18 = arith.constant 0 : index
    %74 = vector.load %arg10[%c16, %c0_18] : memref<64x32xf32, #tpu.memory_space<vmem>>, vector<8x32xf32>
    tpu.vector_store %arg10[%c16, %c0_18], %73 {strides = array<i32>} : memref<64x32xf32, #tpu.memory_space<vmem>>, vector<8x32xf32>,
    %75 = vector.extract_strided_slice %11 {offsets = [24, 0], sizes = [8, 128], strides = [1, 1]} : vector<64x128xf32> to vector<8x128xf32>
    %cst_19 = arith.constant dense<0.000000e+00> : vector<8x128xf32>
    %76 = tpu.matmul %73, %12, %cst_19 {dimension_numbers = #tpu.dot_dimension_numbers<[1], [0], [0], [1], [0, 0, 1, 1], [], []>} : vector<8x32xf32>, vector<32x128xf32>, vector<8x128xf32> -> vector<8x128xf32>
    %77 = arith.addf %75, %76 : vector<8x128xf32>
    %78 = math.tanh %77 : vector<8x128xf32>
    %79 = arith.negf %77 : vector<8x128xf32>
    %80 = math.exp %79 : vector<8x128xf32>
    %cst_20 = arith.constant 1.000000e+00 : f32
    %81 = vector.broadcast %cst_20 : f32 to vector<8x128xf32>
    %82 = arith.addf %81, %80 : vector<8x128xf32>
    %83 = arith.divf %81, %82 : vector<8x128xf32>
    %84 = arith.select %5, %78, %83 : vector<8x128xi1>, vector<8x128xf32>
    %85 = vector.extract_strided_slice %84 {offsets = [0, 0], sizes = [8, 32], strides = [1, 1]} : vector<8x128xf32> to vector<8x32xf32>
    %86 = vector.extract_strided_slice %84 {offsets = [0, 32], sizes = [8, 32], strides = [1, 1]} : vector<8x128xf32> to vector<8x32xf32>
    %87 = vector.extract_strided_slice %84 {offsets = [0, 64], sizes = [8, 32], strides = [1, 1]} : vector<8x128xf32> to vector<8x32xf32>
    %88 = vector.extract_strided_slice %84 {offsets = [0, 96], sizes = [8, 32], strides = [1, 1]} : vector<8x128xf32> to vector<8x32xf32>
    %89 = arith.mulf %86, %71 : vector<8x32xf32>
    %90 = arith.mulf %85, %87 : vector<8x32xf32>
    %91 = arith.addf %89, %90 : vector<8x32xf32>
    %92 = math.tanh %91 : vector<8x32xf32>
    %93 = arith.mulf %88, %92 : vector<8x32xf32>
    %c24 = arith.constant 24 : index
    %c0_21 = arith.constant 0 : index
    %94 = vector.load %arg10[%c24, %c0_21] : memref<64x32xf32, #tpu.memory_space<vmem>>, vector<8x32xf32>
    tpu.vector_store %arg10[%c24, %c0_21], %93 {strides = array<i32>} : memref<64x32xf32, #tpu.memory_space<vmem>>, vector<8x32xf32>,
    %95 = vector.extract_strided_slice %11 {offsets = [32, 0], sizes = [8, 128], strides = [1, 1]} : vector<64x128xf32> to vector<8x128xf32>
    %cst_22 = arith.constant dense<0.000000e+00> : vector<8x128xf32>
    %96 = tpu.matmul %93, %12, %cst_22 {dimension_numbers = #tpu.dot_dimension_numbers<[1], [0], [0], [1], [0, 0, 1, 1], [], []>} : vector<8x32xf32>, vector<32x128xf32>, vector<8x128xf32> -> vector<8x128xf32>
    %97 = arith.addf %95, %96 : vector<8x128xf32>
    %98 = math.tanh %97 : vector<8x128xf32>
    %99 = arith.negf %97 : vector<8x128xf32>
    %100 = math.exp %99 : vector<8x128xf32>
    %cst_23 = arith.constant 1.000000e+00 : f32
    %101 = vector.broadcast %cst_23 : f32 to vector<8x128xf32>
    %102 = arith.addf %101, %100 : vector<8x128xf32>
    %103 = arith.divf %101, %102 : vector<8x128xf32>
    %104 = arith.select %5, %98, %103 : vector<8x128xi1>, vector<8x128xf32>
    %105 = vector.extract_strided_slice %104 {offsets = [0, 0], sizes = [8, 32], strides = [1, 1]} : vector<8x128xf32> to vector<8x32xf32>
    %106 = vector.extract_strided_slice %104 {offsets = [0, 32], sizes = [8, 32], strides = [1, 1]} : vector<8x128xf32> to vector<8x32xf32>
    %107 = vector.extract_strided_slice %104 {offsets = [0, 64], sizes = [8, 32], strides = [1, 1]} : vector<8x128xf32> to vector<8x32xf32>
    %108 = vector.extract_strided_slice %104 {offsets = [0, 96], sizes = [8, 32], strides = [1, 1]} : vector<8x128xf32> to vector<8x32xf32>
    %109 = arith.mulf %106, %91 : vector<8x32xf32>
    %110 = arith.mulf %105, %107 : vector<8x32xf32>
    %111 = arith.addf %109, %110 : vector<8x32xf32>
    %112 = math.tanh %111 : vector<8x32xf32>
    %113 = arith.mulf %108, %112 : vector<8x32xf32>
    %c32 = arith.constant 32 : index
    %c0_24 = arith.constant 0 : index
    %114 = vector.load %arg10[%c32, %c0_24] : memref<64x32xf32, #tpu.memory_space<vmem>>, vector<8x32xf32>
    tpu.vector_store %arg10[%c32, %c0_24], %113 {strides = array<i32>} : memref<64x32xf32, #tpu.memory_space<vmem>>, vector<8x32xf32>,
    %115 = vector.extract_strided_slice %11 {offsets = [40, 0], sizes = [8, 128], strides = [1, 1]} : vector<64x128xf32> to vector<8x128xf32>
    %cst_25 = arith.constant dense<0.000000e+00> : vector<8x128xf32>
    %116 = tpu.matmul %113, %12, %cst_25 {dimension_numbers = #tpu.dot_dimension_numbers<[1], [0], [0], [1], [0, 0, 1, 1], [], []>} : vector<8x32xf32>, vector<32x128xf32>, vector<8x128xf32> -> vector<8x128xf32>
    %117 = arith.addf %115, %116 : vector<8x128xf32>
    %118 = math.tanh %117 : vector<8x128xf32>
    %119 = arith.negf %117 : vector<8x128xf32>
    %120 = math.exp %119 : vector<8x128xf32>
    %cst_26 = arith.constant 1.000000e+00 : f32
    %121 = vector.broadcast %cst_26 : f32 to vector<8x128xf32>
    %122 = arith.addf %121, %120 : vector<8x128xf32>
    %123 = arith.divf %121, %122 : vector<8x128xf32>
    %124 = arith.select %5, %118, %123 : vector<8x128xi1>, vector<8x128xf32>
    %125 = vector.extract_strided_slice %124 {offsets = [0, 0], sizes = [8, 32], strides = [1, 1]} : vector<8x128xf32> to vector<8x32xf32>
    %126 = vector.extract_strided_slice %124 {offsets = [0, 32], sizes = [8, 32], strides = [1, 1]} : vector<8x128xf32> to vector<8x32xf32>
    %127 = vector.extract_strided_slice %124 {offsets = [0, 64], sizes = [8, 32], strides = [1, 1]} : vector<8x128xf32> to vector<8x32xf32>
    %128 = vector.extract_strided_slice %124 {offsets = [0, 96], sizes = [8, 32], strides = [1, 1]} : vector<8x128xf32> to vector<8x32xf32>
    %129 = arith.mulf %126, %111 : vector<8x32xf32>
    %130 = arith.mulf %125, %127 : vector<8x32xf32>
    %131 = arith.addf %129, %130 : vector<8x32xf32>
    %132 = math.tanh %131 : vector<8x32xf32>
    %133 = arith.mulf %128, %132 : vector<8x32xf32>
    %c40 = arith.constant 40 : index
    %c0_27 = arith.constant 0 : index
    %134 = vector.load %arg10[%c40, %c0_27] : memref<64x32xf32, #tpu.memory_space<vmem>>, vector<8x32xf32>
    tpu.vector_store %arg10[%c40, %c0_27], %133 {strides = array<i32>} : memref<64x32xf32, #tpu.memory_space<vmem>>, vector<8x32xf32>,
    %135 = vector.extract_strided_slice %11 {offsets = [48, 0], sizes = [8, 128], strides = [1, 1]} : vector<64x128xf32> to vector<8x128xf32>
    %cst_28 = arith.constant dense<0.000000e+00> : vector<8x128xf32>
    %136 = tpu.matmul %133, %12, %cst_28 {dimension_numbers = #tpu.dot_dimension_numbers<[1], [0], [0], [1], [0, 0, 1, 1], [], []>} : vector<8x32xf32>, vector<32x128xf32>, vector<8x128xf32> -> vector<8x128xf32>
    %137 = arith.addf %135, %136 : vector<8x128xf32>
    %138 = math.tanh %137 : vector<8x128xf32>
    %139 = arith.negf %137 : vector<8x128xf32>
    %140 = math.exp %139 : vector<8x128xf32>
    %cst_29 = arith.constant 1.000000e+00 : f32
    %141 = vector.broadcast %cst_29 : f32 to vector<8x128xf32>
    %142 = arith.addf %141, %140 : vector<8x128xf32>
    %143 = arith.divf %141, %142 : vector<8x128xf32>
    %144 = arith.select %5, %138, %143 : vector<8x128xi1>, vector<8x128xf32>
    %145 = vector.extract_strided_slice %144 {offsets = [0, 0], sizes = [8, 32], strides = [1, 1]} : vector<8x128xf32> to vector<8x32xf32>
    %146 = vector.extract_strided_slice %144 {offsets = [0, 32], sizes = [8, 32], strides = [1, 1]} : vector<8x128xf32> to vector<8x32xf32>
    %147 = vector.extract_strided_slice %144 {offsets = [0, 64], sizes = [8, 32], strides = [1, 1]} : vector<8x128xf32> to vector<8x32xf32>
    %148 = vector.extract_strided_slice %144 {offsets = [0, 96], sizes = [8, 32], strides = [1, 1]} : vector<8x128xf32> to vector<8x32xf32>
    %149 = arith.mulf %146, %131 : vector<8x32xf32>
    %150 = arith.mulf %145, %147 : vector<8x32xf32>
    %151 = arith.addf %149, %150 : vector<8x32xf32>
    %152 = math.tanh %151 : vector<8x32xf32>
    %153 = arith.mulf %148, %152 : vector<8x32xf32>
    %c48 = arith.constant 48 : index
    %c0_30 = arith.constant 0 : index
    %154 = vector.load %arg10[%c48, %c0_30] : memref<64x32xf32, #tpu.memory_space<vmem>>, vector<8x32xf32>
    tpu.vector_store %arg10[%c48, %c0_30], %153 {strides = array<i32>} : memref<64x32xf32, #tpu.memory_space<vmem>>, vector<8x32xf32>,
    %155 = vector.extract_strided_slice %11 {offsets = [56, 0], sizes = [8, 128], strides = [1, 1]} : vector<64x128xf32> to vector<8x128xf32>
    %cst_31 = arith.constant dense<0.000000e+00> : vector<8x128xf32>
    %156 = tpu.matmul %153, %12, %cst_31 {dimension_numbers = #tpu.dot_dimension_numbers<[1], [0], [0], [1], [0, 0, 1, 1], [], []>} : vector<8x32xf32>, vector<32x128xf32>, vector<8x128xf32> -> vector<8x128xf32>
    %157 = arith.addf %155, %156 : vector<8x128xf32>
    %158 = math.tanh %157 : vector<8x128xf32>
    %159 = arith.negf %157 : vector<8x128xf32>
    %160 = math.exp %159 : vector<8x128xf32>
    %cst_32 = arith.constant 1.000000e+00 : f32
    %161 = vector.broadcast %cst_32 : f32 to vector<8x128xf32>
    %162 = arith.addf %161, %160 : vector<8x128xf32>
    %163 = arith.divf %161, %162 : vector<8x128xf32>
    %164 = arith.select %5, %158, %163 : vector<8x128xi1>, vector<8x128xf32>
    %165 = vector.extract_strided_slice %164 {offsets = [0, 0], sizes = [8, 32], strides = [1, 1]} : vector<8x128xf32> to vector<8x32xf32>
    %166 = vector.extract_strided_slice %164 {offsets = [0, 32], sizes = [8, 32], strides = [1, 1]} : vector<8x128xf32> to vector<8x32xf32>
    %167 = vector.extract_strided_slice %164 {offsets = [0, 64], sizes = [8, 32], strides = [1, 1]} : vector<8x128xf32> to vector<8x32xf32>
    %168 = vector.extract_strided_slice %164 {offsets = [0, 96], sizes = [8, 32], strides = [1, 1]} : vector<8x128xf32> to vector<8x32xf32>
    %169 = arith.mulf %166, %151 : vector<8x32xf32>
    %170 = arith.mulf %165, %167 : vector<8x32xf32>
    %171 = arith.addf %169, %170 : vector<8x32xf32>
    %172 = math.tanh %171 : vector<8x32xf32>
    %173 = arith.mulf %168, %172 : vector<8x32xf32>
    %c56 = arith.constant 56 : index
    %c0_33 = arith.constant 0 : index
    %174 = vector.load %arg10[%c56, %c0_33] : memref<64x32xf32, #tpu.memory_space<vmem>>, vector<8x32xf32>
    tpu.vector_store %arg10[%c56, %c0_33], %173 {strides = array<i32>} : memref<64x32xf32, #tpu.memory_space<vmem>>, vector<8x32xf32>,
    %c0_34 = arith.constant 0 : index
    %c0_35 = arith.constant 0 : index
    %175 = vector.load %arg10[%c0_34, %c0_35] : memref<64x32xf32, #tpu.memory_space<vmem>>, vector<64x32xf32>
    %c0_36 = arith.constant 0 : index
    %c0_37 = arith.constant 0 : index
    %176 = vector.load %arg4[%c0_36, %c0_37] : memref<32x128xf32, #tpu.memory_space<vmem>>, vector<32x128xf32>
    %cst_38 = arith.constant dense<0.000000e+00> : vector<64x128xf32>
    %177 = tpu.matmul %175, %176, %cst_38 {dimension_numbers = #tpu.dot_dimension_numbers<[1], [0], [0], [1], [0, 0, 1, 1], [], []>} : vector<64x32xf32>, vector<32x128xf32>, vector<64x128xf32> -> vector<64x128xf32>
    %c0_39 = arith.constant 0 : index
    %c0_40 = arith.constant 0 : index
    %178 = vector.load %arg6[%c0_39, %c0_40] : memref<1x128xf32, #tpu.memory_space<vmem>>, vector<1x128xf32>
    %179 = vector.broadcast %178 : vector<1x128xf32> to vector<64x128xf32>
    %180 = arith.addf %177, %179 : vector<64x128xf32>
    %c0_41 = arith.constant 0 : index
    %c0_42 = arith.constant 0 : index
    %181 = vector.load %arg5[%c0_41, %c0_42] : memref<32x128xf32, #tpu.memory_space<vmem>>, vector<32x128xf32>
    %cst_43 = arith.constant 0.000000e+00 : f32
    %182 = vector.broadcast %cst_43 : f32 to vector<8x32xf32>
    %cst_44 = arith.constant 0.000000e+00 : f32
    %183 = vector.broadcast %cst_44 : f32 to vector<8x32xf32>
    %184 = vector.extract_strided_slice %180 {offsets = [0, 0], sizes = [8, 128], strides = [1, 1]} : vector<64x128xf32> to vector<8x128xf32>
    %cst_45 = arith.constant dense<0.000000e+00> : vector<8x128xf32>
    %185 = tpu.matmul %182, %181, %cst_45 {dimension_numbers = #tpu.dot_dimension_numbers<[1], [0], [0], [1], [0, 0, 1, 1], [], []>} : vector<8x32xf32>, vector<32x128xf32>, vector<8x128xf32> -> vector<8x128xf32>
    %186 = arith.addf %184, %185 : vector<8x128xf32>
    %187 = math.tanh %186 : vector<8x128xf32>
    %188 = arith.negf %186 : vector<8x128xf32>
    %189 = math.exp %188 : vector<8x128xf32>
    %cst_46 = arith.constant 1.000000e+00 : f32
    %190 = vector.broadcast %cst_46 : f32 to vector<8x128xf32>
    %191 = arith.addf %190, %189 : vector<8x128xf32>
    %192 = arith.divf %190, %191 : vector<8x128xf32>
    %193 = arith.select %5, %187, %192 : vector<8x128xi1>, vector<8x128xf32>
    %194 = vector.extract_strided_slice %193 {offsets = [0, 0], sizes = [8, 32], strides = [1, 1]} : vector<8x128xf32> to vector<8x32xf32>
    %195 = vector.extract_strided_slice %193 {offsets = [0, 32], sizes = [8, 32], strides = [1, 1]} : vector<8x128xf32> to vector<8x32xf32>
    %196 = vector.extract_strided_slice %193 {offsets = [0, 64], sizes = [8, 32], strides = [1, 1]} : vector<8x128xf32> to vector<8x32xf32>
    %197 = vector.extract_strided_slice %193 {offsets = [0, 96], sizes = [8, 32], strides = [1, 1]} : vector<8x128xf32> to vector<8x32xf32>
    %198 = arith.mulf %195, %183 : vector<8x32xf32>
    %199 = arith.mulf %194, %196 : vector<8x32xf32>
    %200 = arith.addf %198, %199 : vector<8x32xf32>
    %201 = math.tanh %200 : vector<8x32xf32>
    %202 = arith.mulf %197, %201 : vector<8x32xf32>
    %203 = vector.extract_strided_slice %180 {offsets = [8, 0], sizes = [8, 128], strides = [1, 1]} : vector<64x128xf32> to vector<8x128xf32>
    %cst_47 = arith.constant dense<0.000000e+00> : vector<8x128xf32>
    %204 = tpu.matmul %202, %181, %cst_47 {dimension_numbers = #tpu.dot_dimension_numbers<[1], [0], [0], [1], [0, 0, 1, 1], [], []>} : vector<8x32xf32>, vector<32x128xf32>, vector<8x128xf32> -> vector<8x128xf32>
    %205 = arith.addf %203, %204 : vector<8x128xf32>
    %206 = math.tanh %205 : vector<8x128xf32>
    %207 = arith.negf %205 : vector<8x128xf32>
    %208 = math.exp %207 : vector<8x128xf32>
    %cst_48 = arith.constant 1.000000e+00 : f32
    %209 = vector.broadcast %cst_48 : f32 to vector<8x128xf32>
    %210 = arith.addf %209, %208 : vector<8x128xf32>
    %211 = arith.divf %209, %210 : vector<8x128xf32>
    %212 = arith.select %5, %206, %211 : vector<8x128xi1>, vector<8x128xf32>
    %213 = vector.extract_strided_slice %212 {offsets = [0, 0], sizes = [8, 32], strides = [1, 1]} : vector<8x128xf32> to vector<8x32xf32>
    %214 = vector.extract_strided_slice %212 {offsets = [0, 32], sizes = [8, 32], strides = [1, 1]} : vector<8x128xf32> to vector<8x32xf32>
    %215 = vector.extract_strided_slice %212 {offsets = [0, 64], sizes = [8, 32], strides = [1, 1]} : vector<8x128xf32> to vector<8x32xf32>
    %216 = vector.extract_strided_slice %212 {offsets = [0, 96], sizes = [8, 32], strides = [1, 1]} : vector<8x128xf32> to vector<8x32xf32>
    %217 = arith.mulf %214, %200 : vector<8x32xf32>
    %218 = arith.mulf %213, %215 : vector<8x32xf32>
    %219 = arith.addf %217, %218 : vector<8x32xf32>
    %220 = math.tanh %219 : vector<8x32xf32>
    %221 = arith.mulf %216, %220 : vector<8x32xf32>
    %222 = vector.extract_strided_slice %180 {offsets = [16, 0], sizes = [8, 128], strides = [1, 1]} : vector<64x128xf32> to vector<8x128xf32>
    %cst_49 = arith.constant dense<0.000000e+00> : vector<8x128xf32>
    %223 = tpu.matmul %221, %181, %cst_49 {dimension_numbers = #tpu.dot_dimension_numbers<[1], [0], [0], [1], [0, 0, 1, 1], [], []>} : vector<8x32xf32>, vector<32x128xf32>, vector<8x128xf32> -> vector<8x128xf32>
    %224 = arith.addf %222, %223 : vector<8x128xf32>
    %225 = math.tanh %224 : vector<8x128xf32>
    %226 = arith.negf %224 : vector<8x128xf32>
    %227 = math.exp %226 : vector<8x128xf32>
    %cst_50 = arith.constant 1.000000e+00 : f32
    %228 = vector.broadcast %cst_50 : f32 to vector<8x128xf32>
    %229 = arith.addf %228, %227 : vector<8x128xf32>
    %230 = arith.divf %228, %229 : vector<8x128xf32>
    %231 = arith.select %5, %225, %230 : vector<8x128xi1>, vector<8x128xf32>
    %232 = vector.extract_strided_slice %231 {offsets = [0, 0], sizes = [8, 32], strides = [1, 1]} : vector<8x128xf32> to vector<8x32xf32>
    %233 = vector.extract_strided_slice %231 {offsets = [0, 32], sizes = [8, 32], strides = [1, 1]} : vector<8x128xf32> to vector<8x32xf32>
    %234 = vector.extract_strided_slice %231 {offsets = [0, 64], sizes = [8, 32], strides = [1, 1]} : vector<8x128xf32> to vector<8x32xf32>
    %235 = vector.extract_strided_slice %231 {offsets = [0, 96], sizes = [8, 32], strides = [1, 1]} : vector<8x128xf32> to vector<8x32xf32>
    %236 = arith.mulf %233, %219 : vector<8x32xf32>
    %237 = arith.mulf %232, %234 : vector<8x32xf32>
    %238 = arith.addf %236, %237 : vector<8x32xf32>
    %239 = math.tanh %238 : vector<8x32xf32>
    %240 = arith.mulf %235, %239 : vector<8x32xf32>
    %241 = vector.extract_strided_slice %180 {offsets = [24, 0], sizes = [8, 128], strides = [1, 1]} : vector<64x128xf32> to vector<8x128xf32>
    %cst_51 = arith.constant dense<0.000000e+00> : vector<8x128xf32>
    %242 = tpu.matmul %240, %181, %cst_51 {dimension_numbers = #tpu.dot_dimension_numbers<[1], [0], [0], [1], [0, 0, 1, 1], [], []>} : vector<8x32xf32>, vector<32x128xf32>, vector<8x128xf32> -> vector<8x128xf32>
    %243 = arith.addf %241, %242 : vector<8x128xf32>
    %244 = math.tanh %243 : vector<8x128xf32>
    %245 = arith.negf %243 : vector<8x128xf32>
    %246 = math.exp %245 : vector<8x128xf32>
    %cst_52 = arith.constant 1.000000e+00 : f32
    %247 = vector.broadcast %cst_52 : f32 to vector<8x128xf32>
    %248 = arith.addf %247, %246 : vector<8x128xf32>
    %249 = arith.divf %247, %248 : vector<8x128xf32>
    %250 = arith.select %5, %244, %249 : vector<8x128xi1>, vector<8x128xf32>
    %251 = vector.extract_strided_slice %250 {offsets = [0, 0], sizes = [8, 32], strides = [1, 1]} : vector<8x128xf32> to vector<8x32xf32>
    %252 = vector.extract_strided_slice %250 {offsets = [0, 32], sizes = [8, 32], strides = [1, 1]} : vector<8x128xf32> to vector<8x32xf32>
    %253 = vector.extract_strided_slice %250 {offsets = [0, 64], sizes = [8, 32], strides = [1, 1]} : vector<8x128xf32> to vector<8x32xf32>
    %254 = vector.extract_strided_slice %250 {offsets = [0, 96], sizes = [8, 32], strides = [1, 1]} : vector<8x128xf32> to vector<8x32xf32>
    %255 = arith.mulf %252, %238 : vector<8x32xf32>
    %256 = arith.mulf %251, %253 : vector<8x32xf32>
    %257 = arith.addf %255, %256 : vector<8x32xf32>
    %258 = math.tanh %257 : vector<8x32xf32>
    %259 = arith.mulf %254, %258 : vector<8x32xf32>
    %260 = vector.extract_strided_slice %180 {offsets = [32, 0], sizes = [8, 128], strides = [1, 1]} : vector<64x128xf32> to vector<8x128xf32>
    %cst_53 = arith.constant dense<0.000000e+00> : vector<8x128xf32>
    %261 = tpu.matmul %259, %181, %cst_53 {dimension_numbers = #tpu.dot_dimension_numbers<[1], [0], [0], [1], [0, 0, 1, 1], [], []>} : vector<8x32xf32>, vector<32x128xf32>, vector<8x128xf32> -> vector<8x128xf32>
    %262 = arith.addf %260, %261 : vector<8x128xf32>
    %263 = math.tanh %262 : vector<8x128xf32>
    %264 = arith.negf %262 : vector<8x128xf32>
    %265 = math.exp %264 : vector<8x128xf32>
    %cst_54 = arith.constant 1.000000e+00 : f32
    %266 = vector.broadcast %cst_54 : f32 to vector<8x128xf32>
    %267 = arith.addf %266, %265 : vector<8x128xf32>
    %268 = arith.divf %266, %267 : vector<8x128xf32>
    %269 = arith.select %5, %263, %268 : vector<8x128xi1>, vector<8x128xf32>
    %270 = vector.extract_strided_slice %269 {offsets = [0, 0], sizes = [8, 32], strides = [1, 1]} : vector<8x128xf32> to vector<8x32xf32>
    %271 = vector.extract_strided_slice %269 {offsets = [0, 32], sizes = [8, 32], strides = [1, 1]} : vector<8x128xf32> to vector<8x32xf32>
    %272 = vector.extract_strided_slice %269 {offsets = [0, 64], sizes = [8, 32], strides = [1, 1]} : vector<8x128xf32> to vector<8x32xf32>
    %273 = vector.extract_strided_slice %269 {offsets = [0, 96], sizes = [8, 32], strides = [1, 1]} : vector<8x128xf32> to vector<8x32xf32>
    %274 = arith.mulf %271, %257 : vector<8x32xf32>
    %275 = arith.mulf %270, %272 : vector<8x32xf32>
    %276 = arith.addf %274, %275 : vector<8x32xf32>
    %277 = math.tanh %276 : vector<8x32xf32>
    %278 = arith.mulf %273, %277 : vector<8x32xf32>
    %279 = vector.extract_strided_slice %180 {offsets = [40, 0], sizes = [8, 128], strides = [1, 1]} : vector<64x128xf32> to vector<8x128xf32>
    %cst_55 = arith.constant dense<0.000000e+00> : vector<8x128xf32>
    %280 = tpu.matmul %278, %181, %cst_55 {dimension_numbers = #tpu.dot_dimension_numbers<[1], [0], [0], [1], [0, 0, 1, 1], [], []>} : vector<8x32xf32>, vector<32x128xf32>, vector<8x128xf32> -> vector<8x128xf32>
    %281 = arith.addf %279, %280 : vector<8x128xf32>
    %282 = math.tanh %281 : vector<8x128xf32>
    %283 = arith.negf %281 : vector<8x128xf32>
    %284 = math.exp %283 : vector<8x128xf32>
    %cst_56 = arith.constant 1.000000e+00 : f32
    %285 = vector.broadcast %cst_56 : f32 to vector<8x128xf32>
    %286 = arith.addf %285, %284 : vector<8x128xf32>
    %287 = arith.divf %285, %286 : vector<8x128xf32>
    %288 = arith.select %5, %282, %287 : vector<8x128xi1>, vector<8x128xf32>
    %289 = vector.extract_strided_slice %288 {offsets = [0, 0], sizes = [8, 32], strides = [1, 1]} : vector<8x128xf32> to vector<8x32xf32>
    %290 = vector.extract_strided_slice %288 {offsets = [0, 32], sizes = [8, 32], strides = [1, 1]} : vector<8x128xf32> to vector<8x32xf32>
    %291 = vector.extract_strided_slice %288 {offsets = [0, 64], sizes = [8, 32], strides = [1, 1]} : vector<8x128xf32> to vector<8x32xf32>
    %292 = vector.extract_strided_slice %288 {offsets = [0, 96], sizes = [8, 32], strides = [1, 1]} : vector<8x128xf32> to vector<8x32xf32>
    %293 = arith.mulf %290, %276 : vector<8x32xf32>
    %294 = arith.mulf %289, %291 : vector<8x32xf32>
    %295 = arith.addf %293, %294 : vector<8x32xf32>
    %296 = math.tanh %295 : vector<8x32xf32>
    %297 = arith.mulf %292, %296 : vector<8x32xf32>
    %298 = vector.extract_strided_slice %180 {offsets = [48, 0], sizes = [8, 128], strides = [1, 1]} : vector<64x128xf32> to vector<8x128xf32>
    %cst_57 = arith.constant dense<0.000000e+00> : vector<8x128xf32>
    %299 = tpu.matmul %297, %181, %cst_57 {dimension_numbers = #tpu.dot_dimension_numbers<[1], [0], [0], [1], [0, 0, 1, 1], [], []>} : vector<8x32xf32>, vector<32x128xf32>, vector<8x128xf32> -> vector<8x128xf32>
    %300 = arith.addf %298, %299 : vector<8x128xf32>
    %301 = math.tanh %300 : vector<8x128xf32>
    %302 = arith.negf %300 : vector<8x128xf32>
    %303 = math.exp %302 : vector<8x128xf32>
    %cst_58 = arith.constant 1.000000e+00 : f32
    %304 = vector.broadcast %cst_58 : f32 to vector<8x128xf32>
    %305 = arith.addf %304, %303 : vector<8x128xf32>
    %306 = arith.divf %304, %305 : vector<8x128xf32>
    %307 = arith.select %5, %301, %306 : vector<8x128xi1>, vector<8x128xf32>
    %308 = vector.extract_strided_slice %307 {offsets = [0, 0], sizes = [8, 32], strides = [1, 1]} : vector<8x128xf32> to vector<8x32xf32>
    %309 = vector.extract_strided_slice %307 {offsets = [0, 32], sizes = [8, 32], strides = [1, 1]} : vector<8x128xf32> to vector<8x32xf32>
    %310 = vector.extract_strided_slice %307 {offsets = [0, 64], sizes = [8, 32], strides = [1, 1]} : vector<8x128xf32> to vector<8x32xf32>
    %311 = vector.extract_strided_slice %307 {offsets = [0, 96], sizes = [8, 32], strides = [1, 1]} : vector<8x128xf32> to vector<8x32xf32>
    %312 = arith.mulf %309, %295 : vector<8x32xf32>
    %313 = arith.mulf %308, %310 : vector<8x32xf32>
    %314 = arith.addf %312, %313 : vector<8x32xf32>
    %315 = math.tanh %314 : vector<8x32xf32>
    %316 = arith.mulf %311, %315 : vector<8x32xf32>
    %317 = vector.extract_strided_slice %180 {offsets = [56, 0], sizes = [8, 128], strides = [1, 1]} : vector<64x128xf32> to vector<8x128xf32>
    %cst_59 = arith.constant dense<0.000000e+00> : vector<8x128xf32>
    %318 = tpu.matmul %316, %181, %cst_59 {dimension_numbers = #tpu.dot_dimension_numbers<[1], [0], [0], [1], [0, 0, 1, 1], [], []>} : vector<8x32xf32>, vector<32x128xf32>, vector<8x128xf32> -> vector<8x128xf32>
    %319 = arith.addf %317, %318 : vector<8x128xf32>
    %320 = math.tanh %319 : vector<8x128xf32>
    %321 = arith.negf %319 : vector<8x128xf32>
    %322 = math.exp %321 : vector<8x128xf32>
    %cst_60 = arith.constant 1.000000e+00 : f32
    %323 = vector.broadcast %cst_60 : f32 to vector<8x128xf32>
    %324 = arith.addf %323, %322 : vector<8x128xf32>
    %325 = arith.divf %323, %324 : vector<8x128xf32>
    %326 = arith.select %5, %320, %325 : vector<8x128xi1>, vector<8x128xf32>
    %327 = vector.extract_strided_slice %326 {offsets = [0, 0], sizes = [8, 32], strides = [1, 1]} : vector<8x128xf32> to vector<8x32xf32>
    %328 = vector.extract_strided_slice %326 {offsets = [0, 32], sizes = [8, 32], strides = [1, 1]} : vector<8x128xf32> to vector<8x32xf32>
    %329 = vector.extract_strided_slice %326 {offsets = [0, 64], sizes = [8, 32], strides = [1, 1]} : vector<8x128xf32> to vector<8x32xf32>
    %330 = vector.extract_strided_slice %326 {offsets = [0, 96], sizes = [8, 32], strides = [1, 1]} : vector<8x128xf32> to vector<8x32xf32>
    %331 = arith.mulf %328, %314 : vector<8x32xf32>
    %332 = arith.mulf %327, %329 : vector<8x32xf32>
    %333 = arith.addf %331, %332 : vector<8x32xf32>
    %334 = math.tanh %333 : vector<8x32xf32>
    %335 = arith.mulf %330, %334 : vector<8x32xf32>
    %c0_61 = arith.constant 0 : index
    %c0_62 = arith.constant 0 : index
    %336 = vector.load %arg7[%c0_61, %c0_62] : memref<1x32xf32, #tpu.memory_space<vmem>>, vector<1x32xf32>
    %c0_63 = arith.constant 0 : index
    %c0_64 = arith.constant 0 : index
    %337 = vector.load %arg8[%c0_63, %c0_64] : memref<1x1xf32, #tpu.memory_space<vmem>>, vector<1x1xf32>
    %338 = vector.broadcast %336 : vector<1x32xf32> to vector<8x32xf32>
    %339 = arith.mulf %335, %338 : vector<8x32xf32>
    %cst_65 = arith.constant dense<0.000000e+00> : vector<8xf32>
    %340 = vector.multi_reduction <add>, %339, %cst_65 [1] : vector<8x32xf32> to vector<8xf32>
    %341 = vector.shape_cast %340 : vector<8xf32> to vector<8x1xf32>
    %342 = vector.broadcast %337 : vector<1x1xf32> to vector<8x1xf32>
    %343 = arith.addf %341, %342 : vector<8x1xf32>
    %c0_66 = arith.constant 0 : index
    %c0_67 = arith.constant 0 : index
    %344 = vector.load %arg9[%c0_66, %c0_67] : memref<8x1xf32, #tpu.memory_space<vmem>>, vector<8x1xf32>
    tpu.vector_store %arg9[%c0_66, %c0_67], %343 {strides = array<i32>} : memref<8x1xf32, #tpu.memory_space<vmem>>, vector<8x1xf32>,
    return
  }
}

</mosaic_0001>

<llo_original>
// kernel: tpu_custom_call.1
$region0: #{tpu_custom_call.1}
  #allocation0 [shape = 'u32[]', space=smem, size = 0x4, offset = 0x4, fixed_abs, tag = 'smem constant byte address 0x4 - core index']
  #allocation1 [shape = 'u32[144,128]{1,0:T(1,128)}', space=vmem, size = 0x12000, scoped, tag = 'internal scratch']
  #allocation2 [shape = 'f32[64,32]{1,0:T(8,128)}', space=vmem, size = 0x8000, scoped, tag = 'scratch operand']
  #allocation3 [shape = 'f32[1,1]{1,0:T(1,128)S(1)}', space=vmem, size = 0x200, scoped, tag = 'scoped memory for tpu_custom_call.1']
  %s0 = inlined_call_operand.vmem [shape: f32[64,16], index: 0, kind: input, shape index: {}]
  %s1 = inlined_call_operand.hbm [shape: f32[16,128], index: 1, kind: input, shape index: {}]
  %s2 = inlined_call_operand.vmem [shape: f32[32,128], index: 2, kind: input, shape index: {}]
  %s3 = inlined_call_operand.vmem [shape: f32[1,128], index: 3, kind: input, shape index: {}]
  %s4 = inlined_call_operand.vmem [shape: f32[32,128], index: 4, kind: input, shape index: {}]
  %s5 = inlined_call_operand.vmem [shape: f32[32,128], index: 5, kind: input, shape index: {}]
  %s6 = inlined_call_operand.vmem [shape: f32[1,128], index: 6, kind: input, shape index: {}]
  %s7 = inlined_call_operand.vmem [shape: f32[1,32], index: 7, kind: input, shape index: {}]
  %s8 = inlined_call_operand.<no memory space> [shape: f32[1,1], index: 8, kind: input, shape index: {}]
  %s9 = inlined_call_operand.vmem [shape: f32[8,1], index: 9, kind: output, shape index: {}]
  %s10 = sld [smem:[#allocation0]]
  $region50: #{tpu_custom_call.1} parent=0
    _
  %s12 = ssub.s32 1, %s10
  %s13 = scalar_select 0, %s12, %s10
  %v14 = vstv %s8
  %15 = vst [vmem:[#allocation3] sm:$0x1] %v14
  $region1: #{tpu_custom_call.1} parent=0
    #allocation4 [shape = 'u8[8192]{0}', space=vmem, size = 0x2000, scoped, tag = 'input window, operand 1, single buffered']
    #allocation5 [shape = 's32[1]{0}', space=sflag, size = 0x4, scoped, tag = 'scoped memory for tpu_custom_call.1']
    %16 = vsyncpa [#allocation5], 0
    // Predicated region
    $region2: #{tpu_custom_call.1} parent=1 // pred_check
      _
    $region3: #{tpu_custom_call.1} parent=1 // pred_check_branch
      %18 = sbr.rel (0) target = $region5
    $region4: #{tpu_custom_call.1} parent=1 // pred_region
      _
    $region5: #{tpu_custom_call.1} parent=1 // pred_fallthru
      _
    // Predicated region
    $region6: #{tpu_custom_call.1} parent=1 // pred_check
      _
    $region7: #{tpu_custom_call.1} parent=1 // pred_check_branch
      %20 = sbr.rel (0) target = $region9
    $region8: #{tpu_custom_call.1} parent=1 // pred_region
      %s22 = ssub.s32 256, 256
      %23 = vsyncadd [#allocation5], %s22
      %s24 = sshll.u32 [#allocation4], 4
      %s25 = int_to_ptr.vmem [resolvable:$true] %s24
      %30 = dma.hbm_to_vmem [thread:$0]  %s1, 256, %s25, [#allocation5], 128, 128, 8
    $region9: #{tpu_custom_call.1} parent=1 // pred_fallthru
      _
    // Predicated region
    $region10: #{tpu_custom_call.1} parent=1 // pred_check
      _
    $region11: #{tpu_custom_call.1} parent=1 // pred_check_branch
      %32 = sbr.rel (0) target = $region13
    $region12: #{tpu_custom_call.1} parent=1 // pred_region
      _
    $region13: #{tpu_custom_call.1} parent=1 // pred_fallthru
      _
    // Predicated region
    $region14: #{tpu_custom_call.1} parent=1 // pred_check
      _
    $region15: #{tpu_custom_call.1} parent=1 // pred_check_branch
      %34 = sbr.rel (0) target = $region17
    $region16: #{tpu_custom_call.1} parent=1 // pred_region
      _
    $region17: #{tpu_custom_call.1} parent=1 // pred_fallthru
      _
    // Predicated region
    $region18: #{tpu_custom_call.1} parent=1 // pred_check
      _
    $region19: #{tpu_custom_call.1} parent=1 // pred_check_branch
      %36 = sbr.rel (0) target = $region21
    $region20: #{tpu_custom_call.1} parent=1 // pred_region
      _
    $region21: #{tpu_custom_call.1} parent=1 // pred_fallthru
      _
    // Predicated region
    $region22: #{tpu_custom_call.1} parent=1 // pred_check
      _
    $region23: #{tpu_custom_call.1} parent=1 // pred_check_branch
      %38 = sbr.rel (0) target = $region25
    $region24: #{tpu_custom_call.1} parent=1 // pred_region
      _
    $region25: #{tpu_custom_call.1} parent=1 // pred_fallthru
      _
    // Predicated region
    $region26: #{tpu_custom_call.1} parent=1 // pred_check
      _
    $region27: #{tpu_custom_call.1} parent=1 // pred_check_branch
      %40 = sbr.rel (0) target = $region29
    $region28: #{tpu_custom_call.1} parent=1 // pred_region
      _
    $region29: #{tpu_custom_call.1} parent=1 // pred_fallthru
      _
    // Predicated region
    $region30: #{tpu_custom_call.1} parent=1 // pred_check
      _
    $region31: #{tpu_custom_call.1} parent=1 // pred_check_branch
      %42 = sbr.rel (0) target = $region33
    $region32: #{tpu_custom_call.1} parent=1 // pred_region
      _
    $region33: #{tpu_custom_call.1} parent=1 // pred_fallthru
      _
    // Predicated region
    $region34: #{tpu_custom_call.1} parent=1 // pred_check
      _
    $region35: #{tpu_custom_call.1} parent=1 // pred_check_branch
      %44 = sbr.rel (0) target = $region37
    $region36: #{tpu_custom_call.1} parent=1 // pred_region
      _
    $region37: #{tpu_custom_call.1} parent=1 // pred_fallthru
      _
    // Predicated region
    $region38: #{tpu_custom_call.1} parent=1 // pred_check
      _
    $region39: #{tpu_custom_call.1} parent=1 // pred_check_branch
      %46 = sbr.rel (0) target = $region41
    $region40: #{tpu_custom_call.1} parent=1 // pred_region
      %47 = dma.done [#allocation5], 256
    $region41: #{tpu_custom_call.1} parent=1 // pred_fallthru
      _
    %v48 = vlaneseq
    %v49 = vand.u32 %v48, 127
    %vm50 = vcmp.ge.s32.totalorder %v49, 64
    %vm51 = vcmp.lt.s32.totalorder %v49, 96
    %vm52 = vmand %vm50, %vm51
    %v53 = vld [vmem:[%s0] sm:$0xff]
    %v54 = vld [vmem:[%s0 + $0x8] sm:$0xff]
    %v55 = vld [vmem:[%s0 + $0x10] sm:$0xff]
    %v56 = vld [vmem:[%s0 + $0x18] sm:$0xff]
    %v57 = vld [vmem:[%s0 + $0x20] sm:$0xff]
    %v58 = vld [vmem:[%s0 + $0x28] sm:$0xff]
    %v59 = vld [vmem:[%s0 + $0x30] sm:$0xff]
    %v60 = vld [vmem:[%s0 + $0x38] sm:$0xff]
    %v61 = vld [vmem:[#allocation4] sm:$0xff]
    %v62 = vld [vmem:[#allocation4 + $0x8] sm:$0xff]
    %v63 = vld [vmem:[%s3] sm:$0x1]
    %v65 = vlaneseq
    %v66 = vshrl.u32 %v65, 7
    %v67 = vsub.s32 0, %v66
    %v68 = vrot.slane %v63, %v67
    %vm70 = vcmask 130048
    %v72 = vsel %vm70, %v53, 0
    %v75 = vsel %vm70, %v54, 0
    %v78 = vsel %vm70, %v55, 0
    %v81 = vsel %vm70, %v56, 0
    %v84 = vsel %vm70, %v57, 0
    %v87 = vsel %vm70, %v58, 0
    %v90 = vsel %vm70, %v59, 0
    %v93 = vsel %vm70, %v60, 0
    %95 = vmatprep.subr.mxu0 0.0
    %96 = vmatpush1.msra.mxu0 %v61
    %97 = vmatprep.subr.mxu0 0.0
    %98 = vmatpush1.msra.mxu0 %v62
    %99 = vmatprep.subr.mxu0 0.0
    %100 = vmatpush1.msra.mxu0 0.0
    %101 = vmatprep.subr.mxu0 0.0
    %102 = vmatpush1.msra.mxu0 0.0
    %103 = vmatprep.subr.mxu0 0.0
    %104 = vmatpush1.msra.mxu0 0.0
    %105 = vmatprep.subr.mxu0 0.0
    %106 = vmatpush1.msra.mxu0 0.0
    %107 = vmatprep.subr.mxu0 0.0
    %108 = vmatpush1.msra.mxu0 0.0
    %109 = vmatprep.subr.mxu0 0.0
    %110 = vmatpush1.msra.mxu0 0.0
    %111 = vmatprep.subr.mxu0 0.0
    %112 = vmatpush1.msra.mxu0 0.0
    %113 = vmatprep.subr.mxu0 0.0
    %114 = vmatpush1.msra.mxu0 0.0
    %115 = vmatprep.subr.mxu0 0.0
    %116 = vmatpush1.msra.mxu0 0.0
    %117 = vmatprep.subr.mxu0 0.0
    %118 = vmatpush1.msra.mxu0 0.0
    %119 = vmatprep.subr.mxu0 0.0
    %120 = vmatpush1.msra.mxu0 0.0
    %121 = vmatprep.subr.mxu0 0.0
    %122 = vmatpush1.msra.mxu0 0.0
    %123 = vmatprep.subr.mxu0 0.0
    %124 = vmatpush1.msra.mxu0 0.0
    %125 = vmatprep.subr.mxu0 0.0
    %126 = vmatpush1.msra.mxu0 0.0
    %127 = vmatprep.subr.mxu0 0.0
    %128 = vmatpush1.msra.mxu0 0.0
    %129 = vmatprep.subr.mxu0 0.0
    %130 = vmatpush1.msra.mxu0 0.0
    %131 = vmatprep.subr.mxu0 0.0
    %132 = vmatpush1.msra.mxu0 0.0
    %133 = vmatprep.subr.mxu0 0.0
    %134 = vmatpush1.msra.mxu0 0.0
    %135 = vmatprep.subr.mxu0 0.0
    %136 = vmatpush1.msra.mxu0 0.0
    %137 = vmatprep.subr.mxu0 0.0
    %138 = vmatpush1.msra.mxu0 0.0
    %139 = vmatprep.subr.mxu0 0.0
    %140 = vmatpush1.msra.mxu0 0.0
    %141 = vmatprep.subr.mxu0 0.0
    %142 = vmatpush1.msra.mxu0 0.0
    %143 = vmatprep.subr.mxu0 0.0
    %144 = vmatpush1.msra.mxu0 0.0
    %145 = vmatprep.subr.mxu0 0.0
    %146 = vmatpush1.msra.mxu0 0.0
    %147 = vmatprep.subr.mxu0 0.0
    %148 = vmatpush1.msra.mxu0 0.0
    %149 = vmatprep.subr.mxu0 0.0
    %150 = vmatpush1.msra.mxu0 0.0
    %151 = vmatprep.subr.mxu0 0.0
    %152 = vmatpush1.msra.mxu0 0.0
    %153 = vmatprep.subr.mxu0 0.0
    %154 = vmatpush1.msra.mxu0 0.0
    %155 = vmatprep.subr.mxu0 0.0
    %156 = vmatpush1.msra.mxu0 0.0
    %157 = vmatprep.subr.mxu0 0.0
    %158 = vmatpush1.msra.mxu0 0.0
    %159 = vmatprep.mubr.f32.mxu0 0.0
    %160 = vmatmul.mubr.f32.gmra.mrb[0].mxu0 %v72
    %v161 = vpop.f32.mrb[0].mxu0
    %v162 = vadd.f32 %v68, %v161
    %v163 = vpop.f32.mrb[0].mxu0
    %164 = vmatprep.mubr.f32.mxu0 0.0
    %165 = vmatmul.mubr.f32.gmra.mrb[0].mxu0 %v75
    %v166 = vpop.f32.mrb[0].mxu0
    %v167 = vadd.f32 %v68, %v166
    %v168 = vpop.f32.mrb[0].mxu0
    %169 = vmatprep.mubr.f32.mxu0 0.0
    %170 = vmatmul.mubr.f32.gmra.mrb[0].mxu0 %v78
    %v171 = vpop.f32.mrb[0].mxu0
    %v172 = vadd.f32 %v68, %v171
    %v173 = vpop.f32.mrb[0].mxu0
    %174 = vmatprep.mubr.f32.mxu0 0.0
    %175 = vmatmul.mubr.f32.gmra.mrb[0].mxu0 %v81
    %v176 = vpop.f32.mrb[0].mxu0
    %v177 = vadd.f32 %v68, %v176
    %v178 = vpop.f32.mrb[0].mxu0
    %179 = vmatprep.mubr.f32.mxu0 0.0
    %180 = vmatmul.mubr.f32.gmra.mrb[0].mxu0 %v84
    %v181 = vpop.f32.mrb[0].mxu0
    %v182 = vadd.f32 %v68, %v181
    %v183 = vpop.f32.mrb[0].mxu0
    %184 = vmatprep.mubr.f32.mxu0 0.0
    %185 = vmatmul.mubr.f32.gmra.mrb[0].mxu0 %v87
    %v186 = vpop.f32.mrb[0].mxu0
    %v187 = vadd.f32 %v68, %v186
    %v188 = vpop.f32.mrb[0].mxu0
    %189 = vmatprep.mubr.f32.mxu0 0.0
    %190 = vmatmul.mubr.f32.gmra.mrb[0].mxu0 %v90
    %v191 = vpop.f32.mrb[0].mxu0
    %v192 = vadd.f32 %v68, %v191
    %v193 = vpop.f32.mrb[0].mxu0
    %194 = vmatprep.mubr.f32.mxu0 0.0
    %195 = vmatmul.mubr.f32.gmra.mrb[0].mxu0 %v93
    %v196 = vpop.f32.mrb[0].mxu0
    %v197 = vadd.f32 %v68, %v196
    %v198 = vpop.f32.mrb[0].mxu0
    %199 = vdwg.mxu0
    %v200 = vld [vmem:[%s2] sm:$0xff]
    %v201 = vld [vmem:[%s2 + $0x8] sm:$0xff]
    %v202 = vld [vmem:[%s2 + $0x10] sm:$0xff]
    %v203 = vld [vmem:[%s2 + $0x18] sm:$0xff]
    %vm204 = vcmask 261120
    %v206 = vsel %vm204, 0.0, 0
    %208 = vmatprep.subr.mxu0 0.0
    %209 = vmatpush1.msra.mxu0 %v200
    %210 = vmatprep.subr.mxu0 0.0
    %211 = vmatpush1.msra.mxu0 %v201
    %212 = vmatprep.subr.mxu0 0.0
    %213 = vmatpush1.msra.mxu0 %v202
    %214 = vmatprep.subr.mxu0 0.0
    %215 = vmatpush1.msra.mxu0 %v203
    %216 = vmatprep.subr.mxu0 0.0
    %217 = vmatpush1.msra.mxu0 0.0
    %218 = vmatprep.subr.mxu0 0.0
    %219 = vmatpush1.msra.mxu0 0.0
    %220 = vmatprep.subr.mxu0 0.0
    %221 = vmatpush1.msra.mxu0 0.0
    %222 = vmatprep.subr.mxu0 0.0
    %223 = vmatpush1.msra.mxu0 0.0
    %224 = vmatprep.subr.mxu0 0.0
    %225 = vmatpush1.msra.mxu0 0.0
    %226 = vmatprep.subr.mxu0 0.0
    %227 = vmatpush1.msra.mxu0 0.0
    %228 = vmatprep.subr.mxu0 0.0
    %229 = vmatpush1.msra.mxu0 0.0
    %230 = vmatprep.subr.mxu0 0.0
    %231 = vmatpush1.msra.mxu0 0.0
    %232 = vmatprep.subr.mxu0 0.0
    %233 = vmatpush1.msra.mxu0 0.0
    %234 = vmatprep.subr.mxu0 0.0
    %235 = vmatpush1.msra.mxu0 0.0
    %236 = vmatprep.subr.mxu0 0.0
    %237 = vmatpush1.msra.mxu0 0.0
    %238 = vmatprep.subr.mxu0 0.0
    %239 = vmatpush1.msra.mxu0 0.0
    %240 = vmatprep.subr.mxu0 0.0
    %241 = vmatpush1.msra.mxu0 0.0
    %242 = vmatprep.subr.mxu0 0.0
    %243 = vmatpush1.msra.mxu0 0.0
    %244 = vmatprep.subr.mxu0 0.0
    %245 = vmatpush1.msra.mxu0 0.0
    %246 = vmatprep.subr.mxu0 0.0
    %247 = vmatpush1.msra.mxu0 0.0
    %248 = vmatprep.subr.mxu0 0.0
    %249 = vmatpush1.msra.mxu0 0.0
    %250 = vmatprep.subr.mxu0 0.0
    %251 = vmatpush1.msra.mxu0 0.0
    %252 = vmatprep.subr.mxu0 0.0
    %253 = vmatpush1.msra.mxu0 0.0
    %254 = vmatprep.subr.mxu0 0.0
    %255 = vmatpush1.msra.mxu0 0.0
    %256 = vmatprep.subr.mxu0 0.0
    %257 = vmatpush1.msra.mxu0 0.0
    %258 = vmatprep.subr.mxu0 0.0
    %259 = vmatpush1.msra.mxu0 0.0
    %260 = vmatprep.subr.mxu0 0.0
    %261 = vmatpush1.msra.mxu0 0.0
    %262 = vmatprep.subr.mxu0 0.0
    %263 = vmatpush1.msra.mxu0 0.0
    %264 = vmatprep.subr.mxu0 0.0
    %265 = vmatpush1.msra.mxu0 0.0
    %266 = vmatprep.subr.mxu0 0.0
    %267 = vmatpush1.msra.mxu0 0.0
    %268 = vmatprep.subr.mxu0 0.0
    %269 = vmatpush1.msra.mxu0 0.0
    %270 = vmatprep.subr.mxu0 0.0
    %271 = vmatpush1.msra.mxu0 0.0
    %272 = vmatprep.mubr.f32.mxu0 0.0
    %273 = vmatmul.mubr.f32.gmra.mrb[0].mxu0 %v206
    %v274 = vpop.f32.mrb[0].mxu0
    %v275 = vadd.f32 0.0, %v274
    %v276 = vpop.f32.mrb[0].mxu0
    %277 = vdwg.mxu0
    %v278 = vadd.f32 %v162, %v275
    %v279 = vtanh.pop %v278
    %v280 = vxor.u32 %v278, 2147483648
    %v281 = vmul.f32 %v280, 1.442695
    %v282 = vpow.pop %v281
    %v283 = vadd.f32 %v282, 1.0
    %v284 = vrcp.pop %v283
    %v285 = vmul.f32 1.0, %v284
    %v286 = vsel %vm52, %v279, %v285
    %v287 = vmul.f32 %v286, 0.0
    %289 = vrot.lane.b32.xlu0 %v286, 64
    %v290 = vpop.permute.xlu0 %289
    %v292 = vmul.f32 %v286, %v290
    %294 = vrot.lane.b32.xlu0 %v292, 32
    %v295 = vpop.permute.xlu0 %294
    %v297 = vadd.f32 %v287, %v295
    %v298 = vtanh.pop %v297
    %300 = vrot.lane.b32.xlu0 %v298, 64
    %v301 = vpop.permute.xlu0 %300
    %v303 = vmul.f32 %v286, %v301
    %305 = vrot.lane.b32.xlu0 %v303, 32
    %v306 = vpop.permute.xlu0 %305
    %308 = vst.msk [vmem:[#allocation2] sm:$0xff] %vm204, %v306
    %v309 = vsel %vm204, %v306, 0
    %311 = vmatprep.subr.mxu0 0.0
    %312 = vmatpush1.msra.mxu0 %v200
    %313 = vmatprep.subr.mxu0 0.0
    %314 = vmatpush1.msra.mxu0 %v201
    %315 = vmatprep.subr.mxu0 0.0
    %316 = vmatpush1.msra.mxu0 %v202
    %317 = vmatprep.subr.mxu0 0.0
    %318 = vmatpush1.msra.mxu0 %v203
    %319 = vmatprep.subr.mxu0 0.0
    %320 = vmatpush1.msra.mxu0 0.0
    %321 = vmatprep.subr.mxu0 0.0
    %322 = vmatpush1.msra.mxu0 0.0
    %323 = vmatprep.subr.mxu0 0.0
    %324 = vmatpush1.msra.mxu0 0.0
    %325 = vmatprep.subr.mxu0 0.0
    %326 = vmatpush1.msra.mxu0 0.0
    %327 = vmatprep.subr.mxu0 0.0
    %328 = vmatpush1.msra.mxu0 0.0
    %329 = vmatprep.subr.mxu0 0.0
    %330 = vmatpush1.msra.mxu0 0.0
    %331 = vmatprep.subr.mxu0 0.0
    %332 = vmatpush1.msra.mxu0 0.0
    %333 = vmatprep.subr.mxu0 0.0
    %334 = vmatpush1.msra.mxu0 0.0
    %335 = vmatprep.subr.mxu0 0.0
    %336 = vmatpush1.msra.mxu0 0.0
    %337 = vmatprep.subr.mxu0 0.0
    %338 = vmatpush1.msra.mxu0 0.0
    %339 = vmatprep.subr.mxu0 0.0
    %340 = vmatpush1.msra.mxu0 0.0
    %341 = vmatprep.subr.mxu0 0.0
    %342 = vmatpush1.msra.mxu0 0.0
    %343 = vmatprep.subr.mxu0 0.0
    %344 = vmatpush1.msra.mxu0 0.0
    %345 = vmatprep.subr.mxu0 0.0
    %346 = vmatpush1.msra.mxu0 0.0
    %347 = vmatprep.subr.mxu0 0.0
    %348 = vmatpush1.msra.mxu0 0.0
    %349 = vmatprep.subr.mxu0 0.0
    %350 = vmatpush1.msra.mxu0 0.0
    %351 = vmatprep.subr.mxu0 0.0
    %352 = vmatpush1.msra.mxu0 0.0
    %353 = vmatprep.subr.mxu0 0.0
    %354 = vmatpush1.msra.mxu0 0.0
    %355 = vmatprep.subr.mxu0 0.0
    %356 = vmatpush1.msra.mxu0 0.0
    %357 = vmatprep.subr.mxu0 0.0
    %358 = vmatpush1.msra.mxu0 0.0
    %359 = vmatprep.subr.mxu0 0.0
    %360 = vmatpush1.msra.mxu0 0.0
    %361 = vmatprep.subr.mxu0 0.0
    %362 = vmatpush1.msra.mxu0 0.0
    %363 = vmatprep.subr.mxu0 0.0
    %364 = vmatpush1.msra.mxu0 0.0
    %365 = vmatprep.subr.mxu0 0.0
    %366 = vmatpush1.msra.mxu0 0.0
    %367 = vmatprep.subr.mxu0 0.0
    %368 = vmatpush1.msra.mxu0 0.0
    %369 = vmatprep.subr.mxu0 0.0
    %370 = vmatpush1.msra.mxu0 0.0
    %371 = vmatprep.subr.mxu0 0.0
    %372 = vmatpush1.msra.mxu0 0.0
    %373 = vmatprep.subr.mxu0 0.0
    %374 = vmatpush1.msra.mxu0 0.0
    %375 = vmatprep.mubr.f32.mxu0 0.0
    %376 = vmatmul.mubr.f32.gmra.mrb[0].mxu0 %v309
    %v377 = vpop.f32.mrb[0].mxu0
    %v378 = vadd.f32 0.0, %v377
    %v379 = vpop.f32.mrb[0].mxu0
    %380 = vdwg.mxu0
    %v381 = vadd.f32 %v167, %v378
    %v382 = vtanh.pop %v381
    %v383 = vxor.u32 %v381, 2147483648
    %v384 = vmul.f32 %v383, 1.442695
    %v385 = vpow.pop %v384
    %v386 = vadd.f32 %v385, 1.0
    %v387 = vrcp.pop %v386
    %v388 = vmul.f32 1.0, %v387
    %v389 = vsel %vm52, %v382, %v388
    %v390 = vmul.f32 %v389, %v297
    %392 = vrot.lane.b32.xlu0 %v389, 64
    %v393 = vpop.permute.xlu0 %392
    %v395 = vmul.f32 %v389, %v393
    %397 = vrot.lane.b32.xlu0 %v395, 32
    %v398 = vpop.permute.xlu0 %397
    %v400 = vadd.f32 %v390, %v398
    %v401 = vtanh.pop %v400
    %403 = vrot.lane.b32.xlu0 %v401, 64
    %v404 = vpop.permute.xlu0 %403
    %v406 = vmul.f32 %v389, %v404
    %408 = vrot.lane.b32.xlu0 %v406, 32
    %v409 = vpop.permute.xlu0 %408
    %411 = vst.msk [vmem:[#allocation2 + $0x8] sm:$0xff] %vm204, %v409
    %v412 = vsel %vm204, %v409, 0
    %414 = vmatprep.subr.mxu0 0.0
    %415 = vmatpush1.msra.mxu0 %v200
    %416 = vmatprep.subr.mxu0 0.0
    %417 = vmatpush1.msra.mxu0 %v201
    %418 = vmatprep.subr.mxu0 0.0
    %419 = vmatpush1.msra.mxu0 %v202
    %420 = vmatprep.subr.mxu0 0.0
    %421 = vmatpush1.msra.mxu0 %v203
    %422 = vmatprep.subr.mxu0 0.0
    %423 = vmatpush1.msra.mxu0 0.0
    %424 = vmatprep.subr.mxu0 0.0
    %425 = vmatpush1.msra.mxu0 0.0
    %426 = vmatprep.subr.mxu0 0.0
    %427 = vmatpush1.msra.mxu0 0.0
    %428 = vmatprep.subr.mxu0 0.0
    %429 = vmatpush1.msra.mxu0 0.0
    %430 = vmatprep.subr.mxu0 0.0
    %431 = vmatpush1.msra.mxu0 0.0
    %432 = vmatprep.subr.mxu0 0.0
    %433 = vmatpush1.msra.mxu0 0.0
    %434 = vmatprep.subr.mxu0 0.0
    %435 = vmatpush1.msra.mxu0 0.0
    %436 = vmatprep.subr.mxu0 0.0
    %437 = vmatpush1.msra.mxu0 0.0
    %438 = vmatprep.subr.mxu0 0.0
    %439 = vmatpush1.msra.mxu0 0.0
    %440 = vmatprep.subr.mxu0 0.0
    %441 = vmatpush1.msra.mxu0 0.0
    %442 = vmatprep.subr.mxu0 0.0
    %443 = vmatpush1.msra.mxu0 0.0
    %444 = vmatprep.subr.mxu0 0.0
    %445 = vmatpush1.msra.mxu0 0.0
    %446 = vmatprep.subr.mxu0 0.0
    %447 = vmatpush1.msra.mxu0 0.0
    %448 = vmatprep.subr.mxu0 0.0
    %449 = vmatpush1.msra.mxu0 0.0
    %450 = vmatprep.subr.mxu0 0.0
    %451 = vmatpush1.msra.mxu0 0.0
    %452 = vmatprep.subr.mxu0 0.0
    %453 = vmatpush1.msra.mxu0 0.0
    %454 = vmatprep.subr.mxu0 0.0
    %455 = vmatpush1.msra.mxu0 0.0
    %456 = vmatprep.subr.mxu0 0.0
    %457 = vmatpush1.msra.mxu0 0.0
    %458 = vmatprep.subr.mxu0 0.0
    %459 = vmatpush1.msra.mxu0 0.0
    %460 = vmatprep.subr.mxu0 0.0
    %461 = vmatpush1.msra.mxu0 0.0
    %462 = vmatprep.subr.mxu0 0.0
    %463 = vmatpush1.msra.mxu0 0.0
    %464 = vmatprep.subr.mxu0 0.0
    %465 = vmatpush1.msra.mxu0 0.0
    %466 = vmatprep.subr.mxu0 0.0
    %467 = vmatpush1.msra.mxu0 0.0
    %468 = vmatprep.subr.mxu0 0.0
    %469 = vmatpush1.msra.mxu0 0.0
    %470 = vmatprep.subr.mxu0 0.0
    %471 = vmatpush1.msra.mxu0 0.0
    %472 = vmatprep.subr.mxu0 0.0
    %473 = vmatpush1.msra.mxu0 0.0
    %474 = vmatprep.subr.mxu0 0.0
    %475 = vmatpush1.msra.mxu0 0.0
    %476 = vmatprep.subr.mxu0 0.0
    %477 = vmatpush1.msra.mxu0 0.0
    %478 = vmatprep.mubr.f32.mxu0 0.0
    %479 = vmatmul.mubr.f32.gmra.mrb[0].mxu0 %v412
    %v480 = vpop.f32.mrb[0].mxu0
    %v481 = vadd.f32 0.0, %v480
    %v482 = vpop.f32.mrb[0].mxu0
    %483 = vdwg.mxu0
    %v484 = vadd.f32 %v172, %v481
    %v485 = vtanh.pop %v484
    %v486 = vxor.u32 %v484, 2147483648
    %v487 = vmul.f32 %v486, 1.442695
    %v488 = vpow.pop %v487
    %v489 = vadd.f32 %v488, 1.0
    %v490 = vrcp.pop %v489
    %v491 = vmul.f32 1.0, %v490
    %v492 = vsel %vm52, %v485, %v491
    %v493 = vmul.f32 %v492, %v400
    %495 = vrot.lane.b32.xlu0 %v492, 64
    %v496 = vpop.permute.xlu0 %495
    %v498 = vmul.f32 %v492, %v496
    %500 = vrot.lane.b32.xlu0 %v498, 32
    %v501 = vpop.permute.xlu0 %500
    %v503 = vadd.f32 %v493, %v501
    %v504 = vtanh.pop %v503
    %506 = vrot.lane.b32.xlu0 %v504, 64
    %v507 = vpop.permute.xlu0 %506
    %v509 = vmul.f32 %v492, %v507
    %511 = vrot.lane.b32.xlu0 %v509, 32
    %v512 = vpop.permute.xlu0 %511
    %514 = vst.msk [vmem:[#allocation2 + $0x10] sm:$0xff] %vm204, %v512
    %v515 = vsel %vm204, %v512, 0
    %517 = vmatprep.subr.mxu0 0.0
    %518 = vmatpush1.msra.mxu0 %v200
    %519 = vmatprep.subr.mxu0 0.0
    %520 = vmatpush1.msra.mxu0 %v201
    %521 = vmatprep.subr.mxu0 0.0
    %522 = vmatpush1.msra.mxu0 %v202
    %523 = vmatprep.subr.mxu0 0.0
    %524 = vmatpush1.msra.mxu0 %v203
    %525 = vmatprep.subr.mxu0 0.0
    %526 = vmatpush1.msra.mxu0 0.0
    %527 = vmatprep.subr.mxu0 0.0
    %528 = vmatpush1.msra.mxu0 0.0
    %529 = vmatprep.subr.mxu0 0.0
    %530 = vmatpush1.msra.mxu0 0.0
    %531 = vmatprep.subr.mxu0 0.0
    %532 = vmatpush1.msra.mxu0 0.0
    %533 = vmatprep.subr.mxu0 0.0
    %534 = vmatpush1.msra.mxu0 0.0
    %535 = vmatprep.subr.mxu0 0.0
    %536 = vmatpush1.msra.mxu0 0.0
    %537 = vmatprep.subr.mxu0 0.0
    %538 = vmatpush1.msra.mxu0 0.0
    %539 = vmatprep.subr.mxu0 0.0
    %540 = vmatpush1.msra.mxu0 0.0
    %541 = vmatprep.subr.mxu0 0.0
    %542 = vmatpush1.msra.mxu0 0.0
    %543 = vmatprep.subr.mxu0 0.0
    %544 = vmatpush1.msra.mxu0 0.0
    %545 = vmatprep.subr.mxu0 0.0
    %546 = vmatpush1.msra.mxu0 0.0
    %547 = vmatprep.subr.mxu0 0.0
    %548 = vmatpush1.msra.mxu0 0.0
    %549 = vmatprep.subr.mxu0 0.0
    %550 = vmatpush1.msra.mxu0 0.0
    %551 = vmatprep.subr.mxu0 0.0
    %552 = vmatpush1.msra.mxu0 0.0
    %553 = vmatprep.subr.mxu0 0.0
    %554 = vmatpush1.msra.mxu0 0.0
    %555 = vmatprep.subr.mxu0 0.0
    %556 = vmatpush1.msra.mxu0 0.0
    %557 = vmatprep.subr.mxu0 0.0
    %558 = vmatpush1.msra.mxu0 0.0
    %559 = vmatprep.subr.mxu0 0.0
    %560 = vmatpush1.msra.mxu0 0.0
    %561 = vmatprep.subr.mxu0 0.0
    %562 = vmatpush1.msra.mxu0 0.0
    %563 = vmatprep.subr.mxu0 0.0
    %564 = vmatpush1.msra.mxu0 0.0
    %565 = vmatprep.subr.mxu0 0.0
    %566 = vmatpush1.msra.mxu0 0.0
    %567 = vmatprep.subr.mxu0 0.0
    %568 = vmatpush1.msra.mxu0 0.0
    %569 = vmatprep.subr.mxu0 0.0
    %570 = vmatpush1.msra.mxu0 0.0
    %571 = vmatprep.subr.mxu0 0.0
    %572 = vmatpush1.msra.mxu0 0.0
    %573 = vmatprep.subr.mxu0 0.0
    %574 = vmatpush1.msra.mxu0 0.0
    %575 = vmatprep.subr.mxu0 0.0
    %576 = vmatpush1.msra.mxu0 0.0
    %577 = vmatprep.subr.mxu0 0.0
    %578 = vmatpush1.msra.mxu0 0.0
    %579 = vmatprep.subr.mxu0 0.0
    %580 = vmatpush1.msra.mxu0 0.0
    %581 = vmatprep.mubr.f32.mxu0 0.0
    %582 = vmatmul.mubr.f32.gmra.mrb[0].mxu0 %v515
    %v583 = vpop.f32.mrb[0].mxu0
    %v584 = vadd.f32 0.0, %v583
    %v585 = vpop.f32.mrb[0].mxu0
    %586 = vdwg.mxu0
    %v587 = vadd.f32 %v177, %v584
    %v588 = vtanh.pop %v587
    %v589 = vxor.u32 %v587, 2147483648
    %v590 = vmul.f32 %v589, 1.442695
    %v591 = vpow.pop %v590
    %v592 = vadd.f32 %v591, 1.0
    %v593 = vrcp.pop %v592
    %v594 = vmul.f32 1.0, %v593
    %v595 = vsel %vm52, %v588, %v594
    %v596 = vmul.f32 %v595, %v503
    %598 = vrot.lane.b32.xlu0 %v595, 64
    %v599 = vpop.permute.xlu0 %598
    %v601 = vmul.f32 %v595, %v599
    %603 = vrot.lane.b32.xlu0 %v601, 32
    %v604 = vpop.permute.xlu0 %603
    %v606 = vadd.f32 %v596, %v604
    %v607 = vtanh.pop %v606
    %609 = vrot.lane.b32.xlu0 %v607, 64
    %v610 = vpop.permute.xlu0 %609
    %v612 = vmul.f32 %v595, %v610
    %614 = vrot.lane.b32.xlu0 %v612, 32
    %v615 = vpop.permute.xlu0 %614
    %617 = vst.msk [vmem:[#allocation2 + $0x18] sm:$0xff] %vm204, %v615
    %v618 = vsel %vm204, %v615, 0
    %620 = vmatprep.subr.mxu0 0.0
    %621 = vmatpush1.msra.mxu0 %v200
    %622 = vmatprep.subr.mxu0 0.0
    %623 = vmatpush1.msra.mxu0 %v201
    %624 = vmatprep.subr.mxu0 0.0
    %625 = vmatpush1.msra.mxu0 %v202
    %626 = vmatprep.subr.mxu0 0.0
    %627 = vmatpush1.msra.mxu0 %v203
    %628 = vmatprep.subr.mxu0 0.0
    %629 = vmatpush1.msra.mxu0 0.0
    %630 = vmatprep.subr.mxu0 0.0
    %631 = vmatpush1.msra.mxu0 0.0
    %632 = vmatprep.subr.mxu0 0.0
    %633 = vmatpush1.msra.mxu0 0.0
    %634 = vmatprep.subr.mxu0 0.0
    %635 = vmatpush1.msra.mxu0 0.0
    %636 = vmatprep.subr.mxu0 0.0
    %637 = vmatpush1.msra.mxu0 0.0
    %638 = vmatprep.subr.mxu0 0.0
    %639 = vmatpush1.msra.mxu0 0.0
    %640 = vmatprep.subr.mxu0 0.0
    %641 = vmatpush1.msra.mxu0 0.0
    %642 = vmatprep.subr.mxu0 0.0
    %643 = vmatpush1.msra.mxu0 0.0
    %644 = vmatprep.subr.mxu0 0.0
    %645 = vmatpush1.msra.mxu0 0.0
    %646 = vmatprep.subr.mxu0 0.0
    %647 = vmatpush1.msra.mxu0 0.0
    %648 = vmatprep.subr.mxu0 0.0
    %649 = vmatpush1.msra.mxu0 0.0
    %650 = vmatprep.subr.mxu0 0.0
    %651 = vmatpush1.msra.mxu0 0.0
    %652 = vmatprep.subr.mxu0 0.0
    %653 = vmatpush1.msra.mxu0 0.0
    %654 = vmatprep.subr.mxu0 0.0
    %655 = vmatpush1.msra.mxu0 0.0
    %656 = vmatprep.subr.mxu0 0.0
    %657 = vmatpush1.msra.mxu0 0.0
    %658 = vmatprep.subr.mxu0 0.0
    %659 = vmatpush1.msra.mxu0 0.0
    %660 = vmatprep.subr.mxu0 0.0
    %661 = vmatpush1.msra.mxu0 0.0
    %662 = vmatprep.subr.mxu0 0.0
    %663 = vmatpush1.msra.mxu0 0.0
    %664 = vmatprep.subr.mxu0 0.0
    %665 = vmatpush1.msra.mxu0 0.0
    %666 = vmatprep.subr.mxu0 0.0
    %667 = vmatpush1.msra.mxu0 0.0
    %668 = vmatprep.subr.mxu0 0.0
    %669 = vmatpush1.msra.mxu0 0.0
    %670 = vmatprep.subr.mxu0 0.0
    %671 = vmatpush1.msra.mxu0 0.0
    %672 = vmatprep.subr.mxu0 0.0
    %673 = vmatpush1.msra.mxu0 0.0
    %674 = vmatprep.subr.mxu0 0.0
    %675 = vmatpush1.msra.mxu0 0.0
    %676 = vmatprep.subr.mxu0 0.0
    %677 = vmatpush1.msra.mxu0 0.0
    %678 = vmatprep.subr.mxu0 0.0
    %679 = vmatpush1.msra.mxu0 0.0
    %680 = vmatprep.subr.mxu0 0.0
    %681 = vmatpush1.msra.mxu0 0.0
    %682 = vmatprep.subr.mxu0 0.0
    %683 = vmatpush1.msra.mxu0 0.0
    %684 = vmatprep.mubr.f32.mxu0 0.0
    %685 = vmatmul.mubr.f32.gmra.mrb[0].mxu0 %v618
    %v686 = vpop.f32.mrb[0].mxu0
    %v687 = vadd.f32 0.0, %v686
    %v688 = vpop.f32.mrb[0].mxu0
    %689 = vdwg.mxu0
    %v690 = vadd.f32 %v182, %v687
    %v691 = vtanh.pop %v690
    %v692 = vxor.u32 %v690, 2147483648
    %v693 = vmul.f32 %v692, 1.442695
    %v694 = vpow.pop %v693
    %v695 = vadd.f32 %v694, 1.0
    %v696 = vrcp.pop %v695
    %v697 = vmul.f32 1.0, %v696
    %v698 = vsel %vm52, %v691, %v697
    %v699 = vmul.f32 %v698, %v606
    %701 = vrot.lane.b32.xlu0 %v698, 64
    %v702 = vpop.permute.xlu0 %701
    %v704 = vmul.f32 %v698, %v702
    %706 = vrot.lane.b32.xlu0 %v704, 32
    %v707 = vpop.permute.xlu0 %706
    %v709 = vadd.f32 %v699, %v707
    %v710 = vtanh.pop %v709
    %712 = vrot.lane.b32.xlu0 %v710, 64
    %v713 = vpop.permute.xlu0 %712
    %v715 = vmul.f32 %v698, %v713
    %717 = vrot.lane.b32.xlu0 %v715, 32
    %v718 = vpop.permute.xlu0 %717
    %720 = vst.msk [vmem:[#allocation2 + $0x20] sm:$0xff] %vm204, %v718
    %v721 = vsel %vm204, %v718, 0
    %723 = vmatprep.subr.mxu0 0.0
    %724 = vmatpush1.msra.mxu0 %v200
    %725 = vmatprep.subr.mxu0 0.0
    %726 = vmatpush1.msra.mxu0 %v201
    %727 = vmatprep.subr.mxu0 0.0
    %728 = vmatpush1.msra.mxu0 %v202
    %729 = vmatprep.subr.mxu0 0.0
    %730 = vmatpush1.msra.mxu0 %v203
    %731 = vmatprep.subr.mxu0 0.0
    %732 = vmatpush1.msra.mxu0 0.0
    %733 = vmatprep.subr.mxu0 0.0
    %734 = vmatpush1.msra.mxu0 0.0
    %735 = vmatprep.subr.mxu0 0.0
    %736 = vmatpush1.msra.mxu0 0.0
    %737 = vmatprep.subr.mxu0 0.0
    %738 = vmatpush1.msra.mxu0 0.0
    %739 = vmatprep.subr.mxu0 0.0
    %740 = vmatpush1.msra.mxu0 0.0
    %741 = vmatprep.subr.mxu0 0.0
    %742 = vmatpush1.msra.mxu0 0.0
    %743 = vmatprep.subr.mxu0 0.0
    %744 = vmatpush1.msra.mxu0 0.0
    %745 = vmatprep.subr.mxu0 0.0
    %746 = vmatpush1.msra.mxu0 0.0
    %747 = vmatprep.subr.mxu0 0.0
    %748 = vmatpush1.msra.mxu0 0.0
    %749 = vmatprep.subr.mxu0 0.0
    %750 = vmatpush1.msra.mxu0 0.0
    %751 = vmatprep.subr.mxu0 0.0
    %752 = vmatpush1.msra.mxu0 0.0
    %753 = vmatprep.subr.mxu0 0.0
    %754 = vmatpush1.msra.mxu0 0.0
    %755 = vmatprep.subr.mxu0 0.0
    %756 = vmatpush1.msra.mxu0 0.0
    %757 = vmatprep.subr.mxu0 0.0
    %758 = vmatpush1.msra.mxu0 0.0
    %759 = vmatprep.subr.mxu0 0.0
    %760 = vmatpush1.msra.mxu0 0.0
    %761 = vmatprep.subr.mxu0 0.0
    %762 = vmatpush1.msra.mxu0 0.0
    %763 = vmatprep.subr.mxu0 0.0
    %764 = vmatpush1.msra.mxu0 0.0
    %765 = vmatprep.subr.mxu0 0.0
    %766 = vmatpush1.msra.mxu0 0.0
    %767 = vmatprep.subr.mxu0 0.0
    %768 = vmatpush1.msra.mxu0 0.0
    %769 = vmatprep.subr.mxu0 0.0
    %770 = vmatpush1.msra.mxu0 0.0
    %771 = vmatprep.subr.mxu0 0.0
    %772 = vmatpush1.msra.mxu0 0.0
    %773 = vmatprep.subr.mxu0 0.0
    %774 = vmatpush1.msra.mxu0 0.0
    %775 = vmatprep.subr.mxu0 0.0
    %776 = vmatpush1.msra.mxu0 0.0
    %777 = vmatprep.subr.mxu0 0.0
    %778 = vmatpush1.msra.mxu0 0.0
    %779 = vmatprep.subr.mxu0 0.0
    %780 = vmatpush1.msra.mxu0 0.0
    %781 = vmatprep.subr.mxu0 0.0
    %782 = vmatpush1.msra.mxu0 0.0
    %783 = vmatprep.subr.mxu0 0.0
    %784 = vmatpush1.msra.mxu0 0.0
    %785 = vmatprep.subr.mxu0 0.0
    %786 = vmatpush1.msra.mxu0 0.0
    %787 = vmatprep.mubr.f32.mxu0 0.0
    %788 = vmatmul.mubr.f32.gmra.mrb[0].mxu0 %v721
    %v789 = vpop.f32.mrb[0].mxu0
    %v790 = vadd.f32 0.0, %v789
    %v791 = vpop.f32.mrb[0].mxu0
    %792 = vdwg.mxu0
    %v793 = vadd.f32 %v187, %v790
    %v794 = vtanh.pop %v793
    %v795 = vxor.u32 %v793, 2147483648
    %v796 = vmul.f32 %v795, 1.442695
    %v797 = vpow.pop %v796
    %v798 = vadd.f32 %v797, 1.0
    %v799 = vrcp.pop %v798
    %v800 = vmul.f32 1.0, %v799
    %v801 = vsel %vm52, %v794, %v800
    %v802 = vmul.f32 %v801, %v709
    %804 = vrot.lane.b32.xlu0 %v801, 64
    %v805 = vpop.permute.xlu0 %804
    %v807 = vmul.f32 %v801, %v805
    %809 = vrot.lane.b32.xlu0 %v807, 32
    %v810 = vpop.permute.xlu0 %809
    %v812 = vadd.f32 %v802, %v810
    %v813 = vtanh.pop %v812
    %815 = vrot.lane.b32.xlu0 %v813, 64
    %v816 = vpop.permute.xlu0 %815
    %v818 = vmul.f32 %v801, %v816
    %820 = vrot.lane.b32.xlu0 %v818, 32
    %v821 = vpop.permute.xlu0 %820
    %823 = vst.msk [vmem:[#allocation2 + $0x28] sm:$0xff] %vm204, %v821
    %v824 = vsel %vm204, %v821, 0
    %826 = vmatprep.subr.mxu0 0.0
    %827 = vmatpush1.msra.mxu0 %v200
    %828 = vmatprep.subr.mxu0 0.0
    %829 = vmatpush1.msra.mxu0 %v201
    %830 = vmatprep.subr.mxu0 0.0
    %831 = vmatpush1.msra.mxu0 %v202
    %832 = vmatprep.subr.mxu0 0.0
    %833 = vmatpush1.msra.mxu0 %v203
    %834 = vmatprep.subr.mxu0 0.0
    %835 = vmatpush1.msra.mxu0 0.0
    %836 = vmatprep.subr.mxu0 0.0
    %837 = vmatpush1.msra.mxu0 0.0
    %838 = vmatprep.subr.mxu0 0.0
    %839 = vmatpush1.msra.mxu0 0.0
    %840 = vmatprep.subr.mxu0 0.0
    %841 = vmatpush1.msra.mxu0 0.0
    %842 = vmatprep.subr.mxu0 0.0
    %843 = vmatpush1.msra.mxu0 0.0
    %844 = vmatprep.subr.mxu0 0.0
    %845 = vmatpush1.msra.mxu0 0.0
    %846 = vmatprep.subr.mxu0 0.0
    %847 = vmatpush1.msra.mxu0 0.0
    %848 = vmatprep.subr.mxu0 0.0
    %849 = vmatpush1.msra.mxu0 0.0
    %850 = vmatprep.subr.mxu0 0.0
    %851 = vmatpush1.msra.mxu0 0.0
    %852 = vmatprep.subr.mxu0 0.0
    %853 = vmatpush1.msra.mxu0 0.0
    %854 = vmatprep.subr.mxu0 0.0
    %855 = vmatpush1.msra.mxu0 0.0
    %856 = vmatprep.subr.mxu0 0.0
    %857 = vmatpush1.msra.mxu0 0.0
    %858 = vmatprep.subr.mxu0 0.0
    %859 = vmatpush1.msra.mxu0 0.0
    %860 = vmatprep.subr.mxu0 0.0
    %861 = vmatpush1.msra.mxu0 0.0
    %862 = vmatprep.subr.mxu0 0.0
    %863 = vmatpush1.msra.mxu0 0.0
    %864 = vmatprep.subr.mxu0 0.0
    %865 = vmatpush1.msra.mxu0 0.0
    %866 = vmatprep.subr.mxu0 0.0
    %867 = vmatpush1.msra.mxu0 0.0
    %868 = vmatprep.subr.mxu0 0.0
    %869 = vmatpush1.msra.mxu0 0.0
    %870 = vmatprep.subr.mxu0 0.0
    %871 = vmatpush1.msra.mxu0 0.0
    %872 = vmatprep.subr.mxu0 0.0
    %873 = vmatpush1.msra.mxu0 0.0
    %874 = vmatprep.subr.mxu0 0.0
    %875 = vmatpush1.msra.mxu0 0.0
    %876 = vmatprep.subr.mxu0 0.0
    %877 = vmatpush1.msra.mxu0 0.0
    %878 = vmatprep.subr.mxu0 0.0
    %879 = vmatpush1.msra.mxu0 0.0
    %880 = vmatprep.subr.mxu0 0.0
    %881 = vmatpush1.msra.mxu0 0.0
    %882 = vmatprep.subr.mxu0 0.0
    %883 = vmatpush1.msra.mxu0 0.0
    %884 = vmatprep.subr.mxu0 0.0
    %885 = vmatpush1.msra.mxu0 0.0
    %886 = vmatprep.subr.mxu0 0.0
    %887 = vmatpush1.msra.mxu0 0.0
    %888 = vmatprep.subr.mxu0 0.0
    %889 = vmatpush1.msra.mxu0 0.0
    %890 = vmatprep.mubr.f32.mxu0 0.0
    %891 = vmatmul.mubr.f32.gmra.mrb[0].mxu0 %v824
    %v892 = vpop.f32.mrb[0].mxu0
    %v893 = vadd.f32 0.0, %v892
    %v894 = vpop.f32.mrb[0].mxu0
    %895 = vdwg.mxu0
    %v896 = vadd.f32 %v192, %v893
    %v897 = vtanh.pop %v896
    %v898 = vxor.u32 %v896, 2147483648
    %v899 = vmul.f32 %v898, 1.442695
    %v900 = vpow.pop %v899
    %v901 = vadd.f32 %v900, 1.0
    %v902 = vrcp.pop %v901
    %v903 = vmul.f32 1.0, %v902
    %v904 = vsel %vm52, %v897, %v903
    %v905 = vmul.f32 %v904, %v812
    %907 = vrot.lane.b32.xlu0 %v904, 64
    %v908 = vpop.permute.xlu0 %907
    %v910 = vmul.f32 %v904, %v908
    %912 = vrot.lane.b32.xlu0 %v910, 32
    %v913 = vpop.permute.xlu0 %912
    %v915 = vadd.f32 %v905, %v913
    %v916 = vtanh.pop %v915
    %918 = vrot.lane.b32.xlu0 %v916, 64
    %v919 = vpop.permute.xlu0 %918
    %v921 = vmul.f32 %v904, %v919
    %923 = vrot.lane.b32.xlu0 %v921, 32
    %v924 = vpop.permute.xlu0 %923
    %926 = vst.msk [vmem:[#allocation2 + $0x30] sm:$0xff] %vm204, %v924
    %v927 = vsel %vm204, %v924, 0
    %929 = vmatprep.subr.mxu0 0.0
    %930 = vmatpush1.msra.mxu0 %v200
    %931 = vmatprep.subr.mxu0 0.0
    %932 = vmatpush1.msra.mxu0 %v201
    %933 = vmatprep.subr.mxu0 0.0
    %934 = vmatpush1.msra.mxu0 %v202
    %935 = vmatprep.subr.mxu0 0.0
    %936 = vmatpush1.msra.mxu0 %v203
    %937 = vmatprep.subr.mxu0 0.0
    %938 = vmatpush1.msra.mxu0 0.0
    %939 = vmatprep.subr.mxu0 0.0
    %940 = vmatpush1.msra.mxu0 0.0
    %941 = vmatprep.subr.mxu0 0.0
    %942 = vmatpush1.msra.mxu0 0.0
    %943 = vmatprep.subr.mxu0 0.0
    %944 = vmatpush1.msra.mxu0 0.0
    %945 = vmatprep.subr.mxu0 0.0
    %946 = vmatpush1.msra.mxu0 0.0
    %947 = vmatprep.subr.mxu0 0.0
    %948 = vmatpush1.msra.mxu0 0.0
    %949 = vmatprep.subr.mxu0 0.0
    %950 = vmatpush1.msra.mxu0 0.0
    %951 = vmatprep.subr.mxu0 0.0
    %952 = vmatpush1.msra.mxu0 0.0
    %953 = vmatprep.subr.mxu0 0.0
    %954 = vmatpush1.msra.mxu0 0.0
    %955 = vmatprep.subr.mxu0 0.0
    %956 = vmatpush1.msra.mxu0 0.0
    %957 = vmatprep.subr.mxu0 0.0
    %958 = vmatpush1.msra.mxu0 0.0
    %959 = vmatprep.subr.mxu0 0.0
    %960 = vmatpush1.msra.mxu0 0.0
    %961 = vmatprep.subr.mxu0 0.0
    %962 = vmatpush1.msra.mxu0 0.0
    %963 = vmatprep.subr.mxu0 0.0
    %964 = vmatpush1.msra.mxu0 0.0
    %965 = vmatprep.subr.mxu0 0.0
    %966 = vmatpush1.msra.mxu0 0.0
    %967 = vmatprep.subr.mxu0 0.0
    %968 = vmatpush1.msra.mxu0 0.0
    %969 = vmatprep.subr.mxu0 0.0
    %970 = vmatpush1.msra.mxu0 0.0
    %971 = vmatprep.subr.mxu0 0.0
    %972 = vmatpush1.msra.mxu0 0.0
    %973 = vmatprep.subr.mxu0 0.0
    %974 = vmatpush1.msra.mxu0 0.0
    %975 = vmatprep.subr.mxu0 0.0
    %976 = vmatpush1.msra.mxu0 0.0
    %977 = vmatprep.subr.mxu0 0.0
    %978 = vmatpush1.msra.mxu0 0.0
    %979 = vmatprep.subr.mxu0 0.0
    %980 = vmatpush1.msra.mxu0 0.0
    %981 = vmatprep.subr.mxu0 0.0
    %982 = vmatpush1.msra.mxu0 0.0
    %983 = vmatprep.subr.mxu0 0.0
    %984 = vmatpush1.msra.mxu0 0.0
    %985 = vmatprep.subr.mxu0 0.0
    %986 = vmatpush1.msra.mxu0 0.0
    %987 = vmatprep.subr.mxu0 0.0
    %988 = vmatpush1.msra.mxu0 0.0
    %989 = vmatprep.subr.mxu0 0.0
    %990 = vmatpush1.msra.mxu0 0.0
    %991 = vmatprep.subr.mxu0 0.0
    %992 = vmatpush1.msra.mxu0 0.0
    %993 = vmatprep.mubr.f32.mxu0 0.0
    %994 = vmatmul.mubr.f32.gmra.mrb[0].mxu0 %v927
    %v995 = vpop.f32.mrb[0].mxu0
    %v996 = vadd.f32 0.0, %v995
    %v997 = vpop.f32.mrb[0].mxu0
    %998 = vdwg.mxu0
    %v999 = vadd.f32 %v197, %v996
    %v1000 = vtanh.pop %v999
    %v1001 = vxor.u32 %v999, 2147483648
    %v1002 = vmul.f32 %v1001, 1.442695
    %v1003 = vpow.pop %v1002
    %v1004 = vadd.f32 %v1003, 1.0
    %v1005 = vrcp.pop %v1004
    %v1006 = vmul.f32 1.0, %v1005
    %v1007 = vsel %vm52, %v1000, %v1006
    %v1008 = vmul.f32 %v1007, %v915
    %1010 = vrot.lane.b32.xlu0 %v1007, 64
    %v1011 = vpop.permute.xlu0 %1010
    %v1013 = vmul.f32 %v1007, %v1011
    %1015 = vrot.lane.b32.xlu0 %v1013, 32
    %v1016 = vpop.permute.xlu0 %1015
    %v1018 = vadd.f32 %v1008, %v1016
    %v1019 = vtanh.pop %v1018
    %1021 = vrot.lane.b32.xlu0 %v1019, 64
    %v1022 = vpop.permute.xlu0 %1021
    %v1024 = vmul.f32 %v1007, %v1022
    %1026 = vrot.lane.b32.xlu0 %v1024, 32
    %v1027 = vpop.permute.xlu0 %1026
    %1029 = vst.msk [vmem:[#allocation2 + $0x38] sm:$0xff] %vm204, %v1027
    %v1030 = vld [vmem:[#allocation2] sm:$0xff]
    %v1031 = vld [vmem:[#allocation2 + $0x8] sm:$0xff]
    %v1032 = vld [vmem:[#allocation2 + $0x10] sm:$0xff]
    %v1033 = vld [vmem:[#allocation2 + $0x18] sm:$0xff]
    %v1034 = vld [vmem:[#allocation2 + $0x20] sm:$0xff]
    %v1035 = vld [vmem:[#allocation2 + $0x28] sm:$0xff]
    %v1036 = vld [vmem:[#allocation2 + $0x30] sm:$0xff]
    %v1037 = vld [vmem:[#allocation2 + $0x38] sm:$0xff]
    %v1038 = vld [vmem:[%s4] sm:$0xff]
    %v1039 = vld [vmem:[%s4 + $0x8] sm:$0xff]
    %v1040 = vld [vmem:[%s4 + $0x10] sm:$0xff]
    %v1041 = vld [vmem:[%s4 + $0x18] sm:$0xff]
    %v1042 = vld [vmem:[%s6] sm:$0x1]
    %v1044 = vlaneseq
    %v1045 = vshrl.u32 %v1044, 7
    %v1046 = vsub.s32 0, %v1045
    %v1047 = vrot.slane %v1042, %v1046
    %v1050 = vsel %vm204, %v1030, 0
    %v1053 = vsel %vm204, %v1031, 0
    %v1056 = vsel %vm204, %v1032, 0
    %v1059 = vsel %vm204, %v1033, 0
    %v1062 = vsel %vm204, %v1034, 0
    %v1065 = vsel %vm204, %v1035, 0
    %v1068 = vsel %vm204, %v1036, 0
    %v1071 = vsel %vm204, %v1037, 0
    %1073 = vmatprep.subr.mxu0 0.0
    %1074 = vmatpush1.msra.mxu0 %v1038
    %1075 = vmatprep.subr.mxu0 0.0
    %1076 = vmatpush1.msra.mxu0 %v1039
    %1077 = vmatprep.subr.mxu0 0.0
    %1078 = vmatpush1.msra.mxu0 %v1040
    %1079 = vmatprep.subr.mxu0 0.0
    %1080 = vmatpush1.msra.mxu0 %v1041
    %1081 = vmatprep.subr.mxu0 0.0
    %1082 = vmatpush1.msra.mxu0 0.0
    %1083 = vmatprep.subr.mxu0 0.0
    %1084 = vmatpush1.msra.mxu0 0.0
    %1085 = vmatprep.subr.mxu0 0.0
    %1086 = vmatpush1.msra.mxu0 0.0
    %1087 = vmatprep.subr.mxu0 0.0
    %1088 = vmatpush1.msra.mxu0 0.0
    %1089 = vmatprep.subr.mxu0 0.0
    %1090 = vmatpush1.msra.mxu0 0.0
    %1091 = vmatprep.subr.mxu0 0.0
    %1092 = vmatpush1.msra.mxu0 0.0
    %1093 = vmatprep.subr.mxu0 0.0
    %1094 = vmatpush1.msra.mxu0 0.0
    %1095 = vmatprep.subr.mxu0 0.0
    %1096 = vmatpush1.msra.mxu0 0.0
    %1097 = vmatprep.subr.mxu0 0.0
    %1098 = vmatpush1.msra.mxu0 0.0
    %1099 = vmatprep.subr.mxu0 0.0
    %1100 = vmatpush1.msra.mxu0 0.0
    %1101 = vmatprep.subr.mxu0 0.0
    %1102 = vmatpush1.msra.mxu0 0.0
    %1103 = vmatprep.subr.mxu0 0.0
    %1104 = vmatpush1.msra.mxu0 0.0
    %1105 = vmatprep.subr.mxu0 0.0
    %1106 = vmatpush1.msra.mxu0 0.0
    %1107 = vmatprep.subr.mxu0 0.0
    %1108 = vmatpush1.msra.mxu0 0.0
    %1109 = vmatprep.subr.mxu0 0.0
    %1110 = vmatpush1.msra.mxu0 0.0
    %1111 = vmatprep.subr.mxu0 0.0
    %1112 = vmatpush1.msra.mxu0 0.0
    %1113 = vmatprep.subr.mxu0 0.0
    %1114 = vmatpush1.msra.mxu0 0.0
    %1115 = vmatprep.subr.mxu0 0.0
    %1116 = vmatpush1.msra.mxu0 0.0
    %1117 = vmatprep.subr.mxu0 0.0
    %1118 = vmatpush1.msra.mxu0 0.0
    %1119 = vmatprep.subr.mxu0 0.0
    %1120 = vmatpush1.msra.mxu0 0.0
    %1121 = vmatprep.subr.mxu0 0.0
    %1122 = vmatpush1.msra.mxu0 0.0
    %1123 = vmatprep.subr.mxu0 0.0
    %1124 = vmatpush1.msra.mxu0 0.0
    %1125 = vmatprep.subr.mxu0 0.0
    %1126 = vmatpush1.msra.mxu0 0.0
    %1127 = vmatprep.subr.mxu0 0.0
    %1128 = vmatpush1.msra.mxu0 0.0
    %1129 = vmatprep.subr.mxu0 0.0
    %1130 = vmatpush1.msra.mxu0 0.0
    %1131 = vmatprep.subr.mxu0 0.0
    %1132 = vmatpush1.msra.mxu0 0.0
    %1133 = vmatprep.subr.mxu0 0.0
    %1134 = vmatpush1.msra.mxu0 0.0
    %1135 = vmatprep.subr.mxu0 0.0
    %1136 = vmatpush1.msra.mxu0 0.0
    %1137 = vmatprep.mubr.f32.mxu0 0.0
    %1138 = vmatmul.mubr.f32.gmra.mrb[0].mxu0 %v1050
    %v1139 = vpop.f32.mrb[0].mxu0
    %v1140 = vadd.f32 %v1047, %v1139
    %v1141 = vpop.f32.mrb[0].mxu0
    %1142 = vmatprep.mubr.f32.mxu0 0.0
    %1143 = vmatmul.mubr.f32.gmra.mrb[0].mxu0 %v1053
    %v1144 = vpop.f32.mrb[0].mxu0
    %v1145 = vadd.f32 %v1047, %v1144
    %v1146 = vpop.f32.mrb[0].mxu0
    %1147 = vmatprep.mubr.f32.mxu0 0.0
    %1148 = vmatmul.mubr.f32.gmra.mrb[0].mxu0 %v1056
    %v1149 = vpop.f32.mrb[0].mxu0
    %v1150 = vadd.f32 %v1047, %v1149
    %v1151 = vpop.f32.mrb[0].mxu0
    %1152 = vmatprep.mubr.f32.mxu0 0.0
    %1153 = vmatmul.mubr.f32.gmra.mrb[0].mxu0 %v1059
    %v1154 = vpop.f32.mrb[0].mxu0
    %v1155 = vadd.f32 %v1047, %v1154
    %v1156 = vpop.f32.mrb[0].mxu0
    %1157 = vmatprep.mubr.f32.mxu0 0.0
    %1158 = vmatmul.mubr.f32.gmra.mrb[0].mxu0 %v1062
    %v1159 = vpop.f32.mrb[0].mxu0
    %v1160 = vadd.f32 %v1047, %v1159
    %v1161 = vpop.f32.mrb[0].mxu0
    %1162 = vmatprep.mubr.f32.mxu0 0.0
    %1163 = vmatmul.mubr.f32.gmra.mrb[0].mxu0 %v1065
    %v1164 = vpop.f32.mrb[0].mxu0
    %v1165 = vadd.f32 %v1047, %v1164
    %v1166 = vpop.f32.mrb[0].mxu0
    %1167 = vmatprep.mubr.f32.mxu0 0.0
    %1168 = vmatmul.mubr.f32.gmra.mrb[0].mxu0 %v1068
    %v1169 = vpop.f32.mrb[0].mxu0
    %v1170 = vadd.f32 %v1047, %v1169
    %v1171 = vpop.f32.mrb[0].mxu0
    %1172 = vmatprep.mubr.f32.mxu0 0.0
    %1173 = vmatmul.mubr.f32.gmra.mrb[0].mxu0 %v1071
    %v1174 = vpop.f32.mrb[0].mxu0
    %v1175 = vadd.f32 %v1047, %v1174
    %v1176 = vpop.f32.mrb[0].mxu0
    %1177 = vdwg.mxu0
    %v1178 = vld [vmem:[%s5] sm:$0xff]
    %v1179 = vld [vmem:[%s5 + $0x8] sm:$0xff]
    %v1180 = vld [vmem:[%s5 + $0x10] sm:$0xff]
    %v1181 = vld [vmem:[%s5 + $0x18] sm:$0xff]
    %1182 = vmatprep.subr.mxu0 0.0
    %1183 = vmatpush1.msra.mxu0 %v1178
    %1184 = vmatprep.subr.mxu0 0.0
    %1185 = vmatpush1.msra.mxu0 %v1179
    %1186 = vmatprep.subr.mxu0 0.0
    %1187 = vmatpush1.msra.mxu0 %v1180
    %1188 = vmatprep.subr.mxu0 0.0
    %1189 = vmatpush1.msra.mxu0 %v1181
    %1190 = vmatprep.subr.mxu0 0.0
    %1191 = vmatpush1.msra.mxu0 0.0
    %1192 = vmatprep.subr.mxu0 0.0
    %1193 = vmatpush1.msra.mxu0 0.0
    %1194 = vmatprep.subr.mxu0 0.0
    %1195 = vmatpush1.msra.mxu0 0.0
    %1196 = vmatprep.subr.mxu0 0.0
    %1197 = vmatpush1.msra.mxu0 0.0
    %1198 = vmatprep.subr.mxu0 0.0
    %1199 = vmatpush1.msra.mxu0 0.0
    %1200 = vmatprep.subr.mxu0 0.0
    %1201 = vmatpush1.msra.mxu0 0.0
    %1202 = vmatprep.subr.mxu0 0.0
    %1203 = vmatpush1.msra.mxu0 0.0
    %1204 = vmatprep.subr.mxu0 0.0
    %1205 = vmatpush1.msra.mxu0 0.0
    %1206 = vmatprep.subr.mxu0 0.0
    %1207 = vmatpush1.msra.mxu0 0.0
    %1208 = vmatprep.subr.mxu0 0.0
    %1209 = vmatpush1.msra.mxu0 0.0
    %1210 = vmatprep.subr.mxu0 0.0
    %1211 = vmatpush1.msra.mxu0 0.0
    %1212 = vmatprep.subr.mxu0 0.0
    %1213 = vmatpush1.msra.mxu0 0.0
    %1214 = vmatprep.subr.mxu0 0.0
    %1215 = vmatpush1.msra.mxu0 0.0
    %1216 = vmatprep.subr.mxu0 0.0
    %1217 = vmatpush1.msra.mxu0 0.0
    %1218 = vmatprep.subr.mxu0 0.0
    %1219 = vmatpush1.msra.mxu0 0.0
    %1220 = vmatprep.subr.mxu0 0.0
    %1221 = vmatpush1.msra.mxu0 0.0
    %1222 = vmatprep.subr.mxu0 0.0
    %1223 = vmatpush1.msra.mxu0 0.0
    %1224 = vmatprep.subr.mxu0 0.0
    %1225 = vmatpush1.msra.mxu0 0.0
    %1226 = vmatprep.subr.mxu0 0.0
    %1227 = vmatpush1.msra.mxu0 0.0
    %1228 = vmatprep.subr.mxu0 0.0
    %1229 = vmatpush1.msra.mxu0 0.0
    %1230 = vmatprep.subr.mxu0 0.0
    %1231 = vmatpush1.msra.mxu0 0.0
    %1232 = vmatprep.subr.mxu0 0.0
    %1233 = vmatpush1.msra.mxu0 0.0
    %1234 = vmatprep.subr.mxu0 0.0
    %1235 = vmatpush1.msra.mxu0 0.0
    %1236 = vmatprep.subr.mxu0 0.0
    %1237 = vmatpush1.msra.mxu0 0.0
    %1238 = vmatprep.subr.mxu0 0.0
    %1239 = vmatpush1.msra.mxu0 0.0
    %1240 = vmatprep.subr.mxu0 0.0
    %1241 = vmatpush1.msra.mxu0 0.0
    %1242 = vmatprep.subr.mxu0 0.0
    %1243 = vmatpush1.msra.mxu0 0.0
    %1244 = vmatprep.subr.mxu0 0.0
    %1245 = vmatpush1.msra.mxu0 0.0
    %1246 = vmatprep.mubr.f32.mxu0 0.0
    %1247 = vmatmul.mubr.f32.gmra.mrb[0].mxu0 %v206
    %v1248 = vpop.f32.mrb[0].mxu0
    %v1249 = vadd.f32 0.0, %v1248
    %v1250 = vpop.f32.mrb[0].mxu0
    %1251 = vdwg.mxu0
    %v1252 = vadd.f32 %v1140, %v1249
    %v1253 = vtanh.pop %v1252
    %v1254 = vxor.u32 %v1252, 2147483648
    %v1255 = vmul.f32 %v1254, 1.442695
    %v1256 = vpow.pop %v1255
    %v1257 = vadd.f32 %v1256, 1.0
    %v1258 = vrcp.pop %v1257
    %v1259 = vmul.f32 1.0, %v1258
    %v1260 = vsel %vm52, %v1253, %v1259
    %v1261 = vmul.f32 %v1260, 0.0
    %1263 = vrot.lane.b32.xlu0 %v1260, 64
    %v1264 = vpop.permute.xlu0 %1263
    %v1266 = vmul.f32 %v1260, %v1264
    %1268 = vrot.lane.b32.xlu0 %v1266, 32
    %v1269 = vpop.permute.xlu0 %1268
    %v1271 = vadd.f32 %v1261, %v1269
    %v1272 = vtanh.pop %v1271
    %1274 = vrot.lane.b32.xlu0 %v1272, 64
    %v1275 = vpop.permute.xlu0 %1274
    %v1277 = vmul.f32 %v1260, %v1275
    %1279 = vrot.lane.b32.xlu0 %v1277, 32
    %v1280 = vpop.permute.xlu0 %1279
    %v1281 = vsel %vm204, %v1280, 0
    %1283 = vmatprep.subr.mxu0 0.0
    %1284 = vmatpush1.msra.mxu0 %v1178
    %1285 = vmatprep.subr.mxu0 0.0
    %1286 = vmatpush1.msra.mxu0 %v1179
    %1287 = vmatprep.subr.mxu0 0.0
    %1288 = vmatpush1.msra.mxu0 %v1180
    %1289 = vmatprep.subr.mxu0 0.0
    %1290 = vmatpush1.msra.mxu0 %v1181
    %1291 = vmatprep.subr.mxu0 0.0
    %1292 = vmatpush1.msra.mxu0 0.0
    %1293 = vmatprep.subr.mxu0 0.0
    %1294 = vmatpush1.msra.mxu0 0.0
    %1295 = vmatprep.subr.mxu0 0.0
    %1296 = vmatpush1.msra.mxu0 0.0
    %1297 = vmatprep.subr.mxu0 0.0
    %1298 = vmatpush1.msra.mxu0 0.0
    %1299 = vmatprep.subr.mxu0 0.0
    %1300 = vmatpush1.msra.mxu0 0.0
    %1301 = vmatprep.subr.mxu0 0.0
    %1302 = vmatpush1.msra.mxu0 0.0
    %1303 = vmatprep.subr.mxu0 0.0
    %1304 = vmatpush1.msra.mxu0 0.0
    %1305 = vmatprep.subr.mxu0 0.0
    %1306 = vmatpush1.msra.mxu0 0.0
    %1307 = vmatprep.subr.mxu0 0.0
    %1308 = vmatpush1.msra.mxu0 0.0
    %1309 = vmatprep.subr.mxu0 0.0
    %1310 = vmatpush1.msra.mxu0 0.0
    %1311 = vmatprep.subr.mxu0 0.0
    %1312 = vmatpush1.msra.mxu0 0.0
    %1313 = vmatprep.subr.mxu0 0.0
    %1314 = vmatpush1.msra.mxu0 0.0
    %1315 = vmatprep.subr.mxu0 0.0
    %1316 = vmatpush1.msra.mxu0 0.0
    %1317 = vmatprep.subr.mxu0 0.0
    %1318 = vmatpush1.msra.mxu0 0.0
    %1319 = vmatprep.subr.mxu0 0.0
    %1320 = vmatpush1.msra.mxu0 0.0
    %1321 = vmatprep.subr.mxu0 0.0
    %1322 = vmatpush1.msra.mxu0 0.0
    %1323 = vmatprep.subr.mxu0 0.0
    %1324 = vmatpush1.msra.mxu0 0.0
    %1325 = vmatprep.subr.mxu0 0.0
    %1326 = vmatpush1.msra.mxu0 0.0
    %1327 = vmatprep.subr.mxu0 0.0
    %1328 = vmatpush1.msra.mxu0 0.0
    %1329 = vmatprep.subr.mxu0 0.0
    %1330 = vmatpush1.msra.mxu0 0.0
    %1331 = vmatprep.subr.mxu0 0.0
    %1332 = vmatpush1.msra.mxu0 0.0
    %1333 = vmatprep.subr.mxu0 0.0
    %1334 = vmatpush1.msra.mxu0 0.0
    %1335 = vmatprep.subr.mxu0 0.0
    %1336 = vmatpush1.msra.mxu0 0.0
    %1337 = vmatprep.subr.mxu0 0.0
    %1338 = vmatpush1.msra.mxu0 0.0
    %1339 = vmatprep.subr.mxu0 0.0
    %1340 = vmatpush1.msra.mxu0 0.0
    %1341 = vmatprep.subr.mxu0 0.0
    %1342 = vmatpush1.msra.mxu0 0.0
    %1343 = vmatprep.subr.mxu0 0.0
    %1344 = vmatpush1.msra.mxu0 0.0
    %1345 = vmatprep.subr.mxu0 0.0
    %1346 = vmatpush1.msra.mxu0 0.0
    %1347 = vmatprep.mubr.f32.mxu0 0.0
    %1348 = vmatmul.mubr.f32.gmra.mrb[0].mxu0 %v1281
    %v1349 = vpop.f32.mrb[0].mxu0
    %v1350 = vadd.f32 0.0, %v1349
    %v1351 = vpop.f32.mrb[0].mxu0
    %1352 = vdwg.mxu0
    %v1353 = vadd.f32 %v1145, %v1350
    %v1354 = vtanh.pop %v1353
    %v1355 = vxor.u32 %v1353, 2147483648
    %v1356 = vmul.f32 %v1355, 1.442695
    %v1357 = vpow.pop %v1356
    %v1358 = vadd.f32 %v1357, 1.0
    %v1359 = vrcp.pop %v1358
    %v1360 = vmul.f32 1.0, %v1359
    %v1361 = vsel %vm52, %v1354, %v1360
    %v1362 = vmul.f32 %v1361, %v1271
    %1364 = vrot.lane.b32.xlu0 %v1361, 64
    %v1365 = vpop.permute.xlu0 %1364
    %v1367 = vmul.f32 %v1361, %v1365
    %1369 = vrot.lane.b32.xlu0 %v1367, 32
    %v1370 = vpop.permute.xlu0 %1369
    %v1372 = vadd.f32 %v1362, %v1370
    %v1373 = vtanh.pop %v1372
    %1375 = vrot.lane.b32.xlu0 %v1373, 64
    %v1376 = vpop.permute.xlu0 %1375
    %v1378 = vmul.f32 %v1361, %v1376
    %1380 = vrot.lane.b32.xlu0 %v1378, 32
    %v1381 = vpop.permute.xlu0 %1380
    %v1382 = vsel %vm204, %v1381, 0
    %1384 = vmatprep.subr.mxu0 0.0
    %1385 = vmatpush1.msra.mxu0 %v1178
    %1386 = vmatprep.subr.mxu0 0.0
    %1387 = vmatpush1.msra.mxu0 %v1179
    %1388 = vmatprep.subr.mxu0 0.0
    %1389 = vmatpush1.msra.mxu0 %v1180
    %1390 = vmatprep.subr.mxu0 0.0
    %1391 = vmatpush1.msra.mxu0 %v1181
    %1392 = vmatprep.subr.mxu0 0.0
    %1393 = vmatpush1.msra.mxu0 0.0
    %1394 = vmatprep.subr.mxu0 0.0
    %1395 = vmatpush1.msra.mxu0 0.0
    %1396 = vmatprep.subr.mxu0 0.0
    %1397 = vmatpush1.msra.mxu0 0.0
    %1398 = vmatprep.subr.mxu0 0.0
    %1399 = vmatpush1.msra.mxu0 0.0
    %1400 = vmatprep.subr.mxu0 0.0
    %1401 = vmatpush1.msra.mxu0 0.0
    %1402 = vmatprep.subr.mxu0 0.0
    %1403 = vmatpush1.msra.mxu0 0.0
    %1404 = vmatprep.subr.mxu0 0.0
    %1405 = vmatpush1.msra.mxu0 0.0
    %1406 = vmatprep.subr.mxu0 0.0
    %1407 = vmatpush1.msra.mxu0 0.0
    %1408 = vmatprep.subr.mxu0 0.0
    %1409 = vmatpush1.msra.mxu0 0.0
    %1410 = vmatprep.subr.mxu0 0.0
    %1411 = vmatpush1.msra.mxu0 0.0
    %1412 = vmatprep.subr.mxu0 0.0
    %1413 = vmatpush1.msra.mxu0 0.0
    %1414 = vmatprep.subr.mxu0 0.0
    %1415 = vmatpush1.msra.mxu0 0.0
    %1416 = vmatprep.subr.mxu0 0.0
    %1417 = vmatpush1.msra.mxu0 0.0
    %1418 = vmatprep.subr.mxu0 0.0
    %1419 = vmatpush1.msra.mxu0 0.0
    %1420 = vmatprep.subr.mxu0 0.0
    %1421 = vmatpush1.msra.mxu0 0.0
    %1422 = vmatprep.subr.mxu0 0.0
    %1423 = vmatpush1.msra.mxu0 0.0
    %1424 = vmatprep.subr.mxu0 0.0
    %1425 = vmatpush1.msra.mxu0 0.0
    %1426 = vmatprep.subr.mxu0 0.0
    %1427 = vmatpush1.msra.mxu0 0.0
    %1428 = vmatprep.subr.mxu0 0.0
    %1429 = vmatpush1.msra.mxu0 0.0
    %1430 = vmatprep.subr.mxu0 0.0
    %1431 = vmatpush1.msra.mxu0 0.0
    %1432 = vmatprep.subr.mxu0 0.0
    %1433 = vmatpush1.msra.mxu0 0.0
    %1434 = vmatprep.subr.mxu0 0.0
    %1435 = vmatpush1.msra.mxu0 0.0
    %1436 = vmatprep.subr.mxu0 0.0
    %1437 = vmatpush1.msra.mxu0 0.0
    %1438 = vmatprep.subr.mxu0 0.0
    %1439 = vmatpush1.msra.mxu0 0.0
    %1440 = vmatprep.subr.mxu0 0.0
    %1441 = vmatpush1.msra.mxu0 0.0
    %1442 = vmatprep.subr.mxu0 0.0
    %1443 = vmatpush1.msra.mxu0 0.0
    %1444 = vmatprep.subr.mxu0 0.0
    %1445 = vmatpush1.msra.mxu0 0.0
    %1446 = vmatprep.subr.mxu0 0.0
    %1447 = vmatpush1.msra.mxu0 0.0
    %1448 = vmatprep.mubr.f32.mxu0 0.0
    %1449 = vmatmul.mubr.f32.gmra.mrb[0].mxu0 %v1382
    %v1450 = vpop.f32.mrb[0].mxu0
    %v1451 = vadd.f32 0.0, %v1450
    %v1452 = vpop.f32.mrb[0].mxu0
    %1453 = vdwg.mxu0
    %v1454 = vadd.f32 %v1150, %v1451
    %v1455 = vtanh.pop %v1454
    %v1456 = vxor.u32 %v1454, 2147483648
    %v1457 = vmul.f32 %v1456, 1.442695
    %v1458 = vpow.pop %v1457
    %v1459 = vadd.f32 %v1458, 1.0
    %v1460 = vrcp.pop %v1459
    %v1461 = vmul.f32 1.0, %v1460
    %v1462 = vsel %vm52, %v1455, %v1461
    %v1463 = vmul.f32 %v1462, %v1372
    %1465 = vrot.lane.b32.xlu0 %v1462, 64
    %v1466 = vpop.permute.xlu0 %1465
    %v1468 = vmul.f32 %v1462, %v1466
    %1470 = vrot.lane.b32.xlu0 %v1468, 32
    %v1471 = vpop.permute.xlu0 %1470
    %v1473 = vadd.f32 %v1463, %v1471
    %v1474 = vtanh.pop %v1473
    %1476 = vrot.lane.b32.xlu0 %v1474, 64
    %v1477 = vpop.permute.xlu0 %1476
    %v1479 = vmul.f32 %v1462, %v1477
    %1481 = vrot.lane.b32.xlu0 %v1479, 32
    %v1482 = vpop.permute.xlu0 %1481
    %v1483 = vsel %vm204, %v1482, 0
    %1485 = vmatprep.subr.mxu0 0.0
    %1486 = vmatpush1.msra.mxu0 %v1178
    %1487 = vmatprep.subr.mxu0 0.0
    %1488 = vmatpush1.msra.mxu0 %v1179
    %1489 = vmatprep.subr.mxu0 0.0
    %1490 = vmatpush1.msra.mxu0 %v1180
    %1491 = vmatprep.subr.mxu0 0.0
    %1492 = vmatpush1.msra.mxu0 %v1181
    %1493 = vmatprep.subr.mxu0 0.0
    %1494 = vmatpush1.msra.mxu0 0.0
    %1495 = vmatprep.subr.mxu0 0.0
    %1496 = vmatpush1.msra.mxu0 0.0
    %1497 = vmatprep.subr.mxu0 0.0
    %1498 = vmatpush1.msra.mxu0 0.0
    %1499 = vmatprep.subr.mxu0 0.0
    %1500 = vmatpush1.msra.mxu0 0.0
    %1501 = vmatprep.subr.mxu0 0.0
    %1502 = vmatpush1.msra.mxu0 0.0
    %1503 = vmatprep.subr.mxu0 0.0
    %1504 = vmatpush1.msra.mxu0 0.0
    %1505 = vmatprep.subr.mxu0 0.0
    %1506 = vmatpush1.msra.mxu0 0.0
    %1507 = vmatprep.subr.mxu0 0.0
    %1508 = vmatpush1.msra.mxu0 0.0
    %1509 = vmatprep.subr.mxu0 0.0
    %1510 = vmatpush1.msra.mxu0 0.0
    %1511 = vmatprep.subr.mxu0 0.0
    %1512 = vmatpush1.msra.mxu0 0.0
    %1513 = vmatprep.subr.mxu0 0.0
    %1514 = vmatpush1.msra.mxu0 0.0
    %1515 = vmatprep.subr.mxu0 0.0
    %1516 = vmatpush1.msra.mxu0 0.0
    %1517 = vmatprep.subr.mxu0 0.0
    %1518 = vmatpush1.msra.mxu0 0.0
    %1519 = vmatprep.subr.mxu0 0.0
    %1520 = vmatpush1.msra.mxu0 0.0
    %1521 = vmatprep.subr.mxu0 0.0
    %1522 = vmatpush1.msra.mxu0 0.0
    %1523 = vmatprep.subr.mxu0 0.0
    %1524 = vmatpush1.msra.mxu0 0.0
    %1525 = vmatprep.subr.mxu0 0.0
    %1526 = vmatpush1.msra.mxu0 0.0
    %1527 = vmatprep.subr.mxu0 0.0
    %1528 = vmatpush1.msra.mxu0 0.0
    %1529 = vmatprep.subr.mxu0 0.0
    %1530 = vmatpush1.msra.mxu0 0.0
    %1531 = vmatprep.subr.mxu0 0.0
    %1532 = vmatpush1.msra.mxu0 0.0
    %1533 = vmatprep.subr.mxu0 0.0
    %1534 = vmatpush1.msra.mxu0 0.0
    %1535 = vmatprep.subr.mxu0 0.0
    %1536 = vmatpush1.msra.mxu0 0.0
    %1537 = vmatprep.subr.mxu0 0.0
    %1538 = vmatpush1.msra.mxu0 0.0
    %1539 = vmatprep.subr.mxu0 0.0
    %1540 = vmatpush1.msra.mxu0 0.0
    %1541 = vmatprep.subr.mxu0 0.0
    %1542 = vmatpush1.msra.mxu0 0.0
    %1543 = vmatprep.subr.mxu0 0.0
    %1544 = vmatpush1.msra.mxu0 0.0
    %1545 = vmatprep.subr.mxu0 0.0
    %1546 = vmatpush1.msra.mxu0 0.0
    %1547 = vmatprep.subr.mxu0 0.0
    %1548 = vmatpush1.msra.mxu0 0.0
    %1549 = vmatprep.mubr.f32.mxu0 0.0
    %1550 = vmatmul.mubr.f32.gmra.mrb[0].mxu0 %v1483
    %v1551 = vpop.f32.mrb[0].mxu0
    %v1552 = vadd.f32 0.0, %v1551
    %v1553 = vpop.f32.mrb[0].mxu0
    %1554 = vdwg.mxu0
    %v1555 = vadd.f32 %v1155, %v1552
    %v1556 = vtanh.pop %v1555
    %v1557 = vxor.u32 %v1555, 2147483648
    %v1558 = vmul.f32 %v1557, 1.442695
    %v1559 = vpow.pop %v1558
    %v1560 = vadd.f32 %v1559, 1.0
    %v1561 = vrcp.pop %v1560
    %v1562 = vmul.f32 1.0, %v1561
    %v1563 = vsel %vm52, %v1556, %v1562
    %v1564 = vmul.f32 %v1563, %v1473
    %1566 = vrot.lane.b32.xlu0 %v1563, 64
    %v1567 = vpop.permute.xlu0 %1566
    %v1569 = vmul.f32 %v1563, %v1567
    %1571 = vrot.lane.b32.xlu0 %v1569, 32
    %v1572 = vpop.permute.xlu0 %1571
    %v1574 = vadd.f32 %v1564, %v1572
    %v1575 = vtanh.pop %v1574
    %1577 = vrot.lane.b32.xlu0 %v1575, 64
    %v1578 = vpop.permute.xlu0 %1577
    %v1580 = vmul.f32 %v1563, %v1578
    %1582 = vrot.lane.b32.xlu0 %v1580, 32
    %v1583 = vpop.permute.xlu0 %1582
    %v1584 = vsel %vm204, %v1583, 0
    %1586 = vmatprep.subr.mxu0 0.0
    %1587 = vmatpush1.msra.mxu0 %v1178
    %1588 = vmatprep.subr.mxu0 0.0
    %1589 = vmatpush1.msra.mxu0 %v1179
    %1590 = vmatprep.subr.mxu0 0.0
    %1591 = vmatpush1.msra.mxu0 %v1180
    %1592 = vmatprep.subr.mxu0 0.0
    %1593 = vmatpush1.msra.mxu0 %v1181
    %1594 = vmatprep.subr.mxu0 0.0
    %1595 = vmatpush1.msra.mxu0 0.0
    %1596 = vmatprep.subr.mxu0 0.0
    %1597 = vmatpush1.msra.mxu0 0.0
    %1598 = vmatprep.subr.mxu0 0.0
    %1599 = vmatpush1.msra.mxu0 0.0
    %1600 = vmatprep.subr.mxu0 0.0
    %1601 = vmatpush1.msra.mxu0 0.0
    %1602 = vmatprep.subr.mxu0 0.0
    %1603 = vmatpush1.msra.mxu0 0.0
    %1604 = vmatprep.subr.mxu0 0.0
    %1605 = vmatpush1.msra.mxu0 0.0
    %1606 = vmatprep.subr.mxu0 0.0
    %1607 = vmatpush1.msra.mxu0 0.0
    %1608 = vmatprep.subr.mxu0 0.0
    %1609 = vmatpush1.msra.mxu0 0.0
    %1610 = vmatprep.subr.mxu0 0.0
    %1611 = vmatpush1.msra.mxu0 0.0
    %1612 = vmatprep.subr.mxu0 0.0
    %1613 = vmatpush1.msra.mxu0 0.0
    %1614 = vmatprep.subr.mxu0 0.0
    %1615 = vmatpush1.msra.mxu0 0.0
    %1616 = vmatprep.subr.mxu0 0.0
    %1617 = vmatpush1.msra.mxu0 0.0
    %1618 = vmatprep.subr.mxu0 0.0
    %1619 = vmatpush1.msra.mxu0 0.0
    %1620 = vmatprep.subr.mxu0 0.0
    %1621 = vmatpush1.msra.mxu0 0.0
    %1622 = vmatprep.subr.mxu0 0.0
    %1623 = vmatpush1.msra.mxu0 0.0
    %1624 = vmatprep.subr.mxu0 0.0
    %1625 = vmatpush1.msra.mxu0 0.0
    %1626 = vmatprep.subr.mxu0 0.0
    %1627 = vmatpush1.msra.mxu0 0.0
    %1628 = vmatprep.subr.mxu0 0.0
    %1629 = vmatpush1.msra.mxu0 0.0
    %1630 = vmatprep.subr.mxu0 0.0
    %1631 = vmatpush1.msra.mxu0 0.0
    %1632 = vmatprep.subr.mxu0 0.0
    %1633 = vmatpush1.msra.mxu0 0.0
    %1634 = vmatprep.subr.mxu0 0.0
    %1635 = vmatpush1.msra.mxu0 0.0
    %1636 = vmatprep.subr.mxu0 0.0
    %1637 = vmatpush1.msra.mxu0 0.0
    %1638 = vmatprep.subr.mxu0 0.0
    %1639 = vmatpush1.msra.mxu0 0.0
    %1640 = vmatprep.subr.mxu0 0.0
    %1641 = vmatpush1.msra.mxu0 0.0
    %1642 = vmatprep.subr.mxu0 0.0
    %1643 = vmatpush1.msra.mxu0 0.0
    %1644 = vmatprep.subr.mxu0 0.0
    %1645 = vmatpush1.msra.mxu0 0.0
    %1646 = vmatprep.subr.mxu0 0.0
    %1647 = vmatpush1.msra.mxu0 0.0
    %1648 = vmatprep.subr.mxu0 0.0
    %1649 = vmatpush1.msra.mxu0 0.0
    %1650 = vmatprep.mubr.f32.mxu0 0.0
    %1651 = vmatmul.mubr.f32.gmra.mrb[0].mxu0 %v1584
    %v1652 = vpop.f32.mrb[0].mxu0
    %v1653 = vadd.f32 0.0, %v1652
    %v1654 = vpop.f32.mrb[0].mxu0
    %1655 = vdwg.mxu0
    %v1656 = vadd.f32 %v1160, %v1653
    %v1657 = vtanh.pop %v1656
    %v1658 = vxor.u32 %v1656, 2147483648
    %v1659 = vmul.f32 %v1658, 1.442695
    %v1660 = vpow.pop %v1659
    %v1661 = vadd.f32 %v1660, 1.0
    %v1662 = vrcp.pop %v1661
    %v1663 = vmul.f32 1.0, %v1662
    %v1664 = vsel %vm52, %v1657, %v1663
    %v1665 = vmul.f32 %v1664, %v1574
    %1667 = vrot.lane.b32.xlu0 %v1664, 64
    %v1668 = vpop.permute.xlu0 %1667
    %v1670 = vmul.f32 %v1664, %v1668
    %1672 = vrot.lane.b32.xlu0 %v1670, 32
    %v1673 = vpop.permute.xlu0 %1672
    %v1675 = vadd.f32 %v1665, %v1673
    %v1676 = vtanh.pop %v1675
    %1678 = vrot.lane.b32.xlu0 %v1676, 64
    %v1679 = vpop.permute.xlu0 %1678
    %v1681 = vmul.f32 %v1664, %v1679
    %1683 = vrot.lane.b32.xlu0 %v1681, 32
    %v1684 = vpop.permute.xlu0 %1683
    %v1685 = vsel %vm204, %v1684, 0
    %1687 = vmatprep.subr.mxu0 0.0
    %1688 = vmatpush1.msra.mxu0 %v1178
    %1689 = vmatprep.subr.mxu0 0.0
    %1690 = vmatpush1.msra.mxu0 %v1179
    %1691 = vmatprep.subr.mxu0 0.0
    %1692 = vmatpush1.msra.mxu0 %v1180
    %1693 = vmatprep.subr.mxu0 0.0
    %1694 = vmatpush1.msra.mxu0 %v1181
    %1695 = vmatprep.subr.mxu0 0.0
    %1696 = vmatpush1.msra.mxu0 0.0
    %1697 = vmatprep.subr.mxu0 0.0
    %1698 = vmatpush1.msra.mxu0 0.0
    %1699 = vmatprep.subr.mxu0 0.0
    %1700 = vmatpush1.msra.mxu0 0.0
    %1701 = vmatprep.subr.mxu0 0.0
    %1702 = vmatpush1.msra.mxu0 0.0
    %1703 = vmatprep.subr.mxu0 0.0
    %1704 = vmatpush1.msra.mxu0 0.0
    %1705 = vmatprep.subr.mxu0 0.0
    %1706 = vmatpush1.msra.mxu0 0.0
    %1707 = vmatprep.subr.mxu0 0.0
    %1708 = vmatpush1.msra.mxu0 0.0
    %1709 = vmatprep.subr.mxu0 0.0
    %1710 = vmatpush1.msra.mxu0 0.0
    %1711 = vmatprep.subr.mxu0 0.0
    %1712 = vmatpush1.msra.mxu0 0.0
    %1713 = vmatprep.subr.mxu0 0.0
    %1714 = vmatpush1.msra.mxu0 0.0
    %1715 = vmatprep.subr.mxu0 0.0
    %1716 = vmatpush1.msra.mxu0 0.0
    %1717 = vmatprep.subr.mxu0 0.0
    %1718 = vmatpush1.msra.mxu0 0.0
    %1719 = vmatprep.subr.mxu0 0.0
    %1720 = vmatpush1.msra.mxu0 0.0
    %1721 = vmatprep.subr.mxu0 0.0
    %1722 = vmatpush1.msra.mxu0 0.0
    %1723 = vmatprep.subr.mxu0 0.0
    %1724 = vmatpush1.msra.mxu0 0.0
    %1725 = vmatprep.subr.mxu0 0.0
    %1726 = vmatpush1.msra.mxu0 0.0
    %1727 = vmatprep.subr.mxu0 0.0
    %1728 = vmatpush1.msra.mxu0 0.0
    %1729 = vmatprep.subr.mxu0 0.0
    %1730 = vmatpush1.msra.mxu0 0.0
    %1731 = vmatprep.subr.mxu0 0.0
    %1732 = vmatpush1.msra.mxu0 0.0
    %1733 = vmatprep.subr.mxu0 0.0
    %1734 = vmatpush1.msra.mxu0 0.0
    %1735 = vmatprep.subr.mxu0 0.0
    %1736 = vmatpush1.msra.mxu0 0.0
    %1737 = vmatprep.subr.mxu0 0.0
    %1738 = vmatpush1.msra.mxu0 0.0
    %1739 = vmatprep.subr.mxu0 0.0
    %1740 = vmatpush1.msra.mxu0 0.0
    %1741 = vmatprep.subr.mxu0 0.0
    %1742 = vmatpush1.msra.mxu0 0.0
    %1743 = vmatprep.subr.mxu0 0.0
    %1744 = vmatpush1.msra.mxu0 0.0
    %1745 = vmatprep.subr.mxu0 0.0
    %1746 = vmatpush1.msra.mxu0 0.0
    %1747 = vmatprep.subr.mxu0 0.0
    %1748 = vmatpush1.msra.mxu0 0.0
    %1749 = vmatprep.subr.mxu0 0.0
    %1750 = vmatpush1.msra.mxu0 0.0
    %1751 = vmatprep.mubr.f32.mxu0 0.0
    %1752 = vmatmul.mubr.f32.gmra.mrb[0].mxu0 %v1685
    %v1753 = vpop.f32.mrb[0].mxu0
    %v1754 = vadd.f32 0.0, %v1753
    %v1755 = vpop.f32.mrb[0].mxu0
    %1756 = vdwg.mxu0
    %v1757 = vadd.f32 %v1165, %v1754
    %v1758 = vtanh.pop %v1757
    %v1759 = vxor.u32 %v1757, 2147483648
    %v1760 = vmul.f32 %v1759, 1.442695
    %v1761 = vpow.pop %v1760
    %v1762 = vadd.f32 %v1761, 1.0
    %v1763 = vrcp.pop %v1762
    %v1764 = vmul.f32 1.0, %v1763
    %v1765 = vsel %vm52, %v1758, %v1764
    %v1766 = vmul.f32 %v1765, %v1675
    %1768 = vrot.lane.b32.xlu0 %v1765, 64
    %v1769 = vpop.permute.xlu0 %1768
    %v1771 = vmul.f32 %v1765, %v1769
    %1773 = vrot.lane.b32.xlu0 %v1771, 32
    %v1774 = vpop.permute.xlu0 %1773
    %v1776 = vadd.f32 %v1766, %v1774
    %v1777 = vtanh.pop %v1776
    %1779 = vrot.lane.b32.xlu0 %v1777, 64
    %v1780 = vpop.permute.xlu0 %1779
    %v1782 = vmul.f32 %v1765, %v1780
    %1784 = vrot.lane.b32.xlu0 %v1782, 32
    %v1785 = vpop.permute.xlu0 %1784
    %v1786 = vsel %vm204, %v1785, 0
    %1788 = vmatprep.subr.mxu0 0.0
    %1789 = vmatpush1.msra.mxu0 %v1178
    %1790 = vmatprep.subr.mxu0 0.0
    %1791 = vmatpush1.msra.mxu0 %v1179
    %1792 = vmatprep.subr.mxu0 0.0
    %1793 = vmatpush1.msra.mxu0 %v1180
    %1794 = vmatprep.subr.mxu0 0.0
    %1795 = vmatpush1.msra.mxu0 %v1181
    %1796 = vmatprep.subr.mxu0 0.0
    %1797 = vmatpush1.msra.mxu0 0.0
    %1798 = vmatprep.subr.mxu0 0.0
    %1799 = vmatpush1.msra.mxu0 0.0
    %1800 = vmatprep.subr.mxu0 0.0
    %1801 = vmatpush1.msra.mxu0 0.0
    %1802 = vmatprep.subr.mxu0 0.0
    %1803 = vmatpush1.msra.mxu0 0.0
    %1804 = vmatprep.subr.mxu0 0.0
    %1805 = vmatpush1.msra.mxu0 0.0
    %1806 = vmatprep.subr.mxu0 0.0
    %1807 = vmatpush1.msra.mxu0 0.0
    %1808 = vmatprep.subr.mxu0 0.0
    %1809 = vmatpush1.msra.mxu0 0.0
    %1810 = vmatprep.subr.mxu0 0.0
    %1811 = vmatpush1.msra.mxu0 0.0
    %1812 = vmatprep.subr.mxu0 0.0
    %1813 = vmatpush1.msra.mxu0 0.0
    %1814 = vmatprep.subr.mxu0 0.0
    %1815 = vmatpush1.msra.mxu0 0.0
    %1816 = vmatprep.subr.mxu0 0.0
    %1817 = vmatpush1.msra.mxu0 0.0
    %1818 = vmatprep.subr.mxu0 0.0
    %1819 = vmatpush1.msra.mxu0 0.0
    %1820 = vmatprep.subr.mxu0 0.0
    %1821 = vmatpush1.msra.mxu0 0.0
    %1822 = vmatprep.subr.mxu0 0.0
    %1823 = vmatpush1.msra.mxu0 0.0
    %1824 = vmatprep.subr.mxu0 0.0
    %1825 = vmatpush1.msra.mxu0 0.0
    %1826 = vmatprep.subr.mxu0 0.0
    %1827 = vmatpush1.msra.mxu0 0.0
    %1828 = vmatprep.subr.mxu0 0.0
    %1829 = vmatpush1.msra.mxu0 0.0
    %1830 = vmatprep.subr.mxu0 0.0
    %1831 = vmatpush1.msra.mxu0 0.0
    %1832 = vmatprep.subr.mxu0 0.0
    %1833 = vmatpush1.msra.mxu0 0.0
    %1834 = vmatprep.subr.mxu0 0.0
    %1835 = vmatpush1.msra.mxu0 0.0
    %1836 = vmatprep.subr.mxu0 0.0
    %1837 = vmatpush1.msra.mxu0 0.0
    %1838 = vmatprep.subr.mxu0 0.0
    %1839 = vmatpush1.msra.mxu0 0.0
    %1840 = vmatprep.subr.mxu0 0.0
    %1841 = vmatpush1.msra.mxu0 0.0
    %1842 = vmatprep.subr.mxu0 0.0
    %1843 = vmatpush1.msra.mxu0 0.0
    %1844 = vmatprep.subr.mxu0 0.0
    %1845 = vmatpush1.msra.mxu0 0.0
    %1846 = vmatprep.subr.mxu0 0.0
    %1847 = vmatpush1.msra.mxu0 0.0
    %1848 = vmatprep.subr.mxu0 0.0
    %1849 = vmatpush1.msra.mxu0 0.0
    %1850 = vmatprep.subr.mxu0 0.0
    %1851 = vmatpush1.msra.mxu0 0.0
    %1852 = vmatprep.mubr.f32.mxu0 0.0
    %1853 = vmatmul.mubr.f32.gmra.mrb[0].mxu0 %v1786
    %v1854 = vpop.f32.mrb[0].mxu0
    %v1855 = vadd.f32 0.0, %v1854
    %v1856 = vpop.f32.mrb[0].mxu0
    %1857 = vdwg.mxu0
    %v1858 = vadd.f32 %v1170, %v1855
    %v1859 = vtanh.pop %v1858
    %v1860 = vxor.u32 %v1858, 2147483648
    %v1861 = vmul.f32 %v1860, 1.442695
    %v1862 = vpow.pop %v1861
    %v1863 = vadd.f32 %v1862, 1.0
    %v1864 = vrcp.pop %v1863
    %v1865 = vmul.f32 1.0, %v1864
    %v1866 = vsel %vm52, %v1859, %v1865
    %v1867 = vmul.f32 %v1866, %v1776
    %1869 = vrot.lane.b32.xlu0 %v1866, 64
    %v1870 = vpop.permute.xlu0 %1869
    %v1872 = vmul.f32 %v1866, %v1870
    %1874 = vrot.lane.b32.xlu0 %v1872, 32
    %v1875 = vpop.permute.xlu0 %1874
    %v1877 = vadd.f32 %v1867, %v1875
    %v1878 = vtanh.pop %v1877
    %1880 = vrot.lane.b32.xlu0 %v1878, 64
    %v1881 = vpop.permute.xlu0 %1880
    %v1883 = vmul.f32 %v1866, %v1881
    %1885 = vrot.lane.b32.xlu0 %v1883, 32
    %v1886 = vpop.permute.xlu0 %1885
    %v1887 = vsel %vm204, %v1886, 0
    %1889 = vmatprep.subr.mxu0 0.0
    %1890 = vmatpush1.msra.mxu0 %v1178
    %1891 = vmatprep.subr.mxu0 0.0
    %1892 = vmatpush1.msra.mxu0 %v1179
    %1893 = vmatprep.subr.mxu0 0.0
    %1894 = vmatpush1.msra.mxu0 %v1180
    %1895 = vmatprep.subr.mxu0 0.0
    %1896 = vmatpush1.msra.mxu0 %v1181
    %1897 = vmatprep.subr.mxu0 0.0
    %1898 = vmatpush1.msra.mxu0 0.0
    %1899 = vmatprep.subr.mxu0 0.0
    %1900 = vmatpush1.msra.mxu0 0.0
    %1901 = vmatprep.subr.mxu0 0.0
    %1902 = vmatpush1.msra.mxu0 0.0
    %1903 = vmatprep.subr.mxu0 0.0
    %1904 = vmatpush1.msra.mxu0 0.0
    %1905 = vmatprep.subr.mxu0 0.0
    %1906 = vmatpush1.msra.mxu0 0.0
    %1907 = vmatprep.subr.mxu0 0.0
    %1908 = vmatpush1.msra.mxu0 0.0
    %1909 = vmatprep.subr.mxu0 0.0
    %1910 = vmatpush1.msra.mxu0 0.0
    %1911 = vmatprep.subr.mxu0 0.0
    %1912 = vmatpush1.msra.mxu0 0.0
    %1913 = vmatprep.subr.mxu0 0.0
    %1914 = vmatpush1.msra.mxu0 0.0
    %1915 = vmatprep.subr.mxu0 0.0
    %1916 = vmatpush1.msra.mxu0 0.0
    %1917 = vmatprep.subr.mxu0 0.0
    %1918 = vmatpush1.msra.mxu0 0.0
    %1919 = vmatprep.subr.mxu0 0.0
    %1920 = vmatpush1.msra.mxu0 0.0
    %1921 = vmatprep.subr.mxu0 0.0
    %1922 = vmatpush1.msra.mxu0 0.0
    %1923 = vmatprep.subr.mxu0 0.0
    %1924 = vmatpush1.msra.mxu0 0.0
    %1925 = vmatprep.subr.mxu0 0.0
    %1926 = vmatpush1.msra.mxu0 0.0
    %1927 = vmatprep.subr.mxu0 0.0
    %1928 = vmatpush1.msra.mxu0 0.0
    %1929 = vmatprep.subr.mxu0 0.0
    %1930 = vmatpush1.msra.mxu0 0.0
    %1931 = vmatprep.subr.mxu0 0.0
    %1932 = vmatpush1.msra.mxu0 0.0
    %1933 = vmatprep.subr.mxu0 0.0
    %1934 = vmatpush1.msra.mxu0 0.0
    %1935 = vmatprep.subr.mxu0 0.0
    %1936 = vmatpush1.msra.mxu0 0.0
    %1937 = vmatprep.subr.mxu0 0.0
    %1938 = vmatpush1.msra.mxu0 0.0
    %1939 = vmatprep.subr.mxu0 0.0
    %1940 = vmatpush1.msra.mxu0 0.0
    %1941 = vmatprep.subr.mxu0 0.0
    %1942 = vmatpush1.msra.mxu0 0.0
    %1943 = vmatprep.subr.mxu0 0.0
    %1944 = vmatpush1.msra.mxu0 0.0
    %1945 = vmatprep.subr.mxu0 0.0
    %1946 = vmatpush1.msra.mxu0 0.0
    %1947 = vmatprep.subr.mxu0 0.0
    %1948 = vmatpush1.msra.mxu0 0.0
    %1949 = vmatprep.subr.mxu0 0.0
    %1950 = vmatpush1.msra.mxu0 0.0
    %1951 = vmatprep.subr.mxu0 0.0
    %1952 = vmatpush1.msra.mxu0 0.0
    %1953 = vmatprep.mubr.f32.mxu0 0.0
    %1954 = vmatmul.mubr.f32.gmra.mrb[0].mxu0 %v1887
    %v1955 = vpop.f32.mrb[0].mxu0
    %v1956 = vadd.f32 0.0, %v1955
    %v1957 = vpop.f32.mrb[0].mxu0
    %1958 = vdwg.mxu0
    %v1959 = vadd.f32 %v1175, %v1956
    %v1960 = vtanh.pop %v1959
    %v1961 = vxor.u32 %v1959, 2147483648
    %v1962 = vmul.f32 %v1961, 1.442695
    %v1963 = vpow.pop %v1962
    %v1964 = vadd.f32 %v1963, 1.0
    %v1965 = vrcp.pop %v1964
    %v1966 = vmul.f32 1.0, %v1965
    %v1967 = vsel %vm52, %v1960, %v1966
    %v1968 = vmul.f32 %v1967, %v1877
    %1970 = vrot.lane.b32.xlu0 %v1967, 64
    %v1971 = vpop.permute.xlu0 %1970
    %v1973 = vmul.f32 %v1967, %v1971
    %1975 = vrot.lane.b32.xlu0 %v1973, 32
    %v1976 = vpop.permute.xlu0 %1975
    %v1978 = vadd.f32 %v1968, %v1976
    %v1979 = vtanh.pop %v1978
    %1981 = vrot.lane.b32.xlu0 %v1979, 64
    %v1982 = vpop.permute.xlu0 %1981
    %v1984 = vmul.f32 %v1967, %v1982
    %v1985 = vld [vmem:[%s7] sm:$0x1]
    %v1986 = vld [vmem:[#allocation3] sm:$0x1]
    %v1988 = vlaneseq
    %v1989 = vshrl.u32 %v1988, 7
    %v1990 = vsub.s32 0, %v1989
    %v1991 = vrot.slane %v1985, %v1990
    %1992 = vrot.lane.b32.xlu0 %v1991, 96
    %v1993 = vpop.permute.xlu0 %1992
    %v1995 = vmul.f32 %v1984, %v1993
    %1997 = vrot.lane.b32.xlu0 %v1995, 32
    %v1998 = vpop.permute.xlu0 %1997
    %v2000 = vsel %vm204, %v1998, 0.0
    %2001 = vadd.xlane.f32.xlu0 %v2000
    %v2002 = vpop.xlane.xlu0 %2001
    %v2004 = vlaneseq
    %v2005 = vshrl.u32 %v2004, 7
    %v2006 = vsub.s32 0, %v2005
    %v2007 = vrot.slane %v1986, %v2006
    %v2009 = vadd.f32 %v2002, %v2007
    %vm2010 = vcmask 7168
    %2011 = vst.msk [vmem:[%s9] sm:$0xff] %vm2010, %v2009
    // Predicated region
    $region42: #{tpu_custom_call.1} parent=1 // pred_check
      _
    $region43: #{tpu_custom_call.1} parent=1 // pred_check_branch
      %2013 = sbr.rel (0) target = $region45
    $region44: #{tpu_custom_call.1} parent=1 // pred_region
      _
    $region45: #{tpu_custom_call.1} parent=1 // pred_fallthru
      _
    // Predicated region
    $region46: #{tpu_custom_call.1} parent=1 // pred_check
      _
    $region47: #{tpu_custom_call.1} parent=1 // pred_check_branch
      %2015 = sbr.rel (0) target = $region49
    $region48: #{tpu_custom_call.1} parent=1 // pred_region
      _
    $region49: #{tpu_custom_call.1} parent=1 // pred_fallthru
      _
    %2016 = vsyncpa [#allocation5], 1

</llo_original>
